<compile_context>
chip_gen: v6e
topology: v6e:2x2x1
jax: 0.10.0
libtpu: 0.0.40
codegen_flags: <defaults>
</compile_context>

<pallas_src>
import jax
import jax.numpy as jnp
from jax.experimental import pallas as pl
from jax.experimental.pallas import tpu as pltpu

# ----------------------------- config ---------------------------------------
C_IN = 4          # config.c_in
NF = 8            # config.nf
KSIZE = 3         # config.ksize
CLASS_NUM = 5     # config.class_num
POS = -1          # config.pos  -> timepooling is Nothing()
BN_EPS = 1e-5

B = 2             # batch
T = 16            # sequence length (time)

CP = 2 * NF       # padded channel width used throughout the kernel (16)
BT = B * T        # folded batch*time rows (32)
OUT_ROWS = 8      # sublane-padded output rows
OUT_LANES = 128   # lane-dense output width

assert BT % 8 == 0 and B <= OUT_ROWS and T * B == BT

# ------------------ packed parameter slab layout (static) --------------------
# One (P_ROWS, 128) f32 slab holds every parameter; row offsets below are
# compile-time constants used for static in-kernel slicing.
CONVW_OFF = 0                           # 9 convs x (3*CP, CP) -> rows [0, 432)
CONVW_ROWS = 9 * KSIZE * CP             # 432
SCW_OFF = CONVW_OFF + CONVW_ROWS        # 2 shortcuts x (CP, CP) -> [432, 464)
SCW_ROWS = 2 * CP
WFC_OFF = SCW_OFF + SCW_ROWS            # fc weight (CP, 128)     -> [464, 480)
WFC_ROWS = CP
POOL_OFF = WFC_OFF + WFC_ROWS           # pooling matrix (8, BT)  -> [480, 488)
POOL_ROWS = OUT_ROWS
CONVB_OFF = POOL_OFF + POOL_ROWS        # 9 conv biases, 1 row ea -> [488, 497)
SCB_OFF = CONVB_OFF + 9                 # 2 shortcut biases       -> [497, 499)
BFC_OFF = SCB_OFF + 2                   # fc bias                 -> row 499
P_ROWS = ((BFC_OFF + 1 + 7) // 8) * 8   # 504 (padded to a sublane multiple)

# Advisory cost estimate (XLA scheduling hint around the custom call).
_FLOPS = (9 * 2 * BT * (KSIZE * CP) * CP      # 9 tap-packed convs
          + 2 * 2 * BT * CP * CP              # 2 projection shortcuts
          + 2 * OUT_ROWS * BT * CP            # fused avg-pool matmul
          + 2 * OUT_ROWS * CP * OUT_LANES)    # fc
_BYTES = (BT * CP + P_ROWS * 128 + OUT_ROWS * OUT_LANES) * 4


# ------------------------------ kernel ---------------------------------------
def resnet_kernel(x_ref, p_ref, out_ref):
    h = x_ref[...]                                     # (BT, CP) f32

    # Hoisted conv-shift validity masks (computed once, reused by all 9 convs).
    # A shifted row is invalid if it crosses a batch boundary in the folded slab.
    tmod = jax.lax.broadcasted_iota(jnp.int32, (BT, CP), 0) % T
    valid_m1 = tmod > 0            # h[t-1] exists
    valid_p1 = tmod < (T - 1)      # h[t+1] exists
    zeros = jnp.zeros((BT, CP), jnp.float32)

    def conv(v, wi):
        # tap-packed 'same' K=3 conv: build the (BT, 3*CP) shifted-taps slab
        # and issue a single MXU matmul per conv.
        s_m1 = jnp.where(valid_m1, pltpu.roll(v, shift=1, axis=0), zeros)       # h[t-1]
        s_p1 = jnp.where(valid_p1, pltpu.roll(v, shift=BT - 1, axis=0), zeros)  # h[t+1]
        taps = jnp.concatenate([s_m1, v, s_p1], axis=1)                         # (BT, 3*CP)
        w = p_ref[CONVW_OFF + wi * KSIZE * CP:
                  CONVW_OFF + (wi + 1) * KSIZE * CP, 0:CP]                      # (3*CP, CP)
        b = p_ref[CONVB_OFF + wi: CONVB_OFF + wi + 1, 0:CP]                     # (1, CP)
        return jnp.dot(taps, w, preferred_element_type=jnp.float32) + b

    wi = 0
    for blk in range(3):
        if blk < 2:
            # projection shortcut (folded 1x1 conv + BN) when c_in != c_out
            scw = p_ref[SCW_OFF + blk * CP: SCW_OFF + (blk + 1) * CP, 0:CP]
            scb = p_ref[SCB_OFF + blk: SCB_OFF + blk + 1, 0:CP]
            sc = jnp.dot(h, scw, preferred_element_type=jnp.float32) + scb
        else:
            # identity shortcut (c_in == c_out): no matmul, no params
            sc = h
        y = jnp.maximum(conv(h, wi), 0.0)
        y = jnp.maximum(conv(y, wi + 1), 0.0)
        y = conv(y, wi + 2)
        h = jnp.maximum(y + sc, 0.0)
        wi += 3

    # AdaptiveAvgPool1d(1) fused into the MXU: the (OUT_ROWS, BT) block-diagonal
    # 1/T segment-mean matrix is a compile-time constant read from the param
    # slab (rows >= B are all-zero), so the epilogue has no iota/select work.
    pool = p_ref[POOL_OFF: POOL_OFF + OUT_ROWS, 0:BT]                   # (8, BT)
    pooled = jnp.dot(pool, h, preferred_element_type=jnp.float32)       # (8, CP)

    # Linear layer on a lane-dense padded output slab (sliced in the wrapper).
    wfc = p_ref[WFC_OFF: WFC_OFF + CP, :]                               # (CP, 128)
    bfc = p_ref[BFC_OFF: BFC_OFF + 1, :]                                # (1, 128)
    logits = jnp.dot(pooled, wfc, preferred_element_type=jnp.float32) + bfc
    out_ref[...] = logits.astype(out_ref.dtype)


# ------------------------------ wrapper ---------------------------------------
def resnet_forward(x, param_slab):
    """x: (B, T, C_IN) float32 (same as the PyTorch module input, pre-permute)."""
    Bb, Tt, _ = x.shape
    assert Bb == B and Tt == T
    assert param_slab.shape == (P_ROWS, 128)

    # Fold batch into one (B*T, CP) slab, zero-padding channels to CP.
    x_slab = jnp.zeros((BT, CP), jnp.float32).at[:, :C_IN].set(
        x.reshape(BT, C_IN).astype(jnp.float32))

    out = pl.pallas_call(
        resnet_kernel,
        out_shape=jax.ShapeDtypeStruct((OUT_ROWS, OUT_LANES), jnp.float32),
        grid_spec=pltpu.PrefetchScalarGridSpec(
            num_scalar_prefetch=0,
            grid=(1,),                      # whole problem in one invocation
            in_specs=[pl.BlockSpec((BT, CP), lambda i: (0, 0)),
                      pl.BlockSpec((P_ROWS, 128), lambda i: (0, 0))],
            out_specs=pl.BlockSpec((OUT_ROWS, OUT_LANES), lambda i: (0, 0)),
        ),
        compiler_params=pltpu.CompilerParams(
            dimension_semantics=("arbitrary",)),
        cost_estimate=pl.CostEstimate(
            flops=_FLOPS, transcendentals=0, bytes_accessed=_BYTES),
    )(x_slab, param_slab)
    return out[:Bb, :CLASS_NUM]


# -------------------------- parameter construction ----------------------------
def _fold_bn(w, b, gamma, beta, mean, var):
    """Fold inference-mode BatchNorm1d into the preceding conv (per out-channel)."""
    scale = gamma / jnp.sqrt(var + BN_EPS)
    return w * scale, (b - mean) * scale + beta


def _conv_bn_params(key, k, ci, co):
    k1, k2, k3, k4, k5, k6 = jax.random.split(key, 6)
    w = 0.2 * jax.random.normal(k1, (k, ci, co), jnp.float32)
    b = 0.1 * jax.random.normal(k2, (co,), jnp.float32)
    gamma = 1.0 + 0.1 * jax.random.normal(k3, (co,), jnp.float32)
    beta = 0.1 * jax.random.normal(k4, (co,), jnp.float32)
    mean = 0.1 * jax.random.normal(k5, (co,), jnp.float32)
    var = 0.5 + 0.5 * jnp.abs(jax.random.normal(k6, (co,), jnp.float32))
    return _fold_bn(w, b, gamma, beta, mean, var)


def make_params(key):
    """Natural (unpadded) parameters with BN folded into the convs."""
    dims = [(C_IN, NF), (NF, 2 * NF), (2 * NF, 2 * NF)]
    conv_w, conv_b, sc_w, sc_b = [], [], [], []
    for blk, (ci, co) in enumerate(dims):
        keys = jax.random.split(jax.random.fold_in(key, blk), 4)
        for j, (ki, ko) in enumerate([(ci, co), (co, co), (co, co)]):
            w, b = _conv_bn_params(keys[j], KSIZE, ki, ko)
            conv_w.append(w)
            conv_b.append(b)
        if ci != co:                       # shortcut = 1x1 conv + BN (folded)
            ws, bs = _conv_bn_params(keys[3], 1, ci, co)
            sc_w.append(ws.reshape(ci, co))
            sc_b.append(bs)
        # else: identity shortcut -> no parameters at all
    kfc1, kfc2 = jax.random.split(jax.random.fold_in(key, 99))
    wfc = 0.2 * jax.random.normal(kfc1, (2 * NF, CLASS_NUM), jnp.float32)
    bfc = 0.1 * jax.random.normal(kfc2, (CLASS_NUM,), jnp.float32)
    return dict(conv_w=conv_w, conv_b=conv_b, sc_w=sc_w, sc_b=sc_b,
                fc_w=wfc, fc_b=bfc)


def pack_params(p):
    """Pack ALL parameters (and the constant pooling matrix) into ONE padded
    (P_ROWS, 128) f32 slab -> a single parameter DMA."""
    slab = jnp.zeros((P_ROWS, 128), jnp.float32)

    # conv weights, tap-packed: (K, ci, co) -> (K*CP, CP), channel-zero-padded
    for wi, w in enumerate(p['conv_w']):
        K, ci, co = w.shape
        wp = jnp.zeros((K, CP, CP), jnp.float32).at[:, :ci, :co].set(w)
        slab = slab.at[CONVW_OFF + wi * K * CP:
                       CONVW_OFF + (wi + 1) * K * CP, :CP].set(wp.reshape(K * CP, CP))

    # shortcut (1x1 conv) weights: (ci, co) -> (CP, CP)
    for blk, w in enumerate(p['sc_w']):
        ci, co = w.shape
        slab = slab.at[SCW_OFF + blk * CP: SCW_OFF + blk * CP + ci, :co].set(w)

    # fc weight (CP, 128) + fc bias (row)
    slab = slab.at[WFC_OFF: WFC_OFF + 2 * NF, :CLASS_NUM].set(p['fc_w'])
    slab = slab.at[BFC_OFF, :CLASS_NUM].set(p['fc_b'])

    # constant block-diagonal 1/T segment-mean pooling matrix (rows >= B zero)
    for r in range(B):
        slab = slab.at[POOL_OFF + r, r * T:(r + 1) * T].set(1.0 / T)

    # biases: one row each
    for wi, b in enumerate(p['conv_b']):
        slab = slab.at[CONVB_OFF + wi, :b.shape[0]].set(b)
    for blk, b in enumerate(p['sc_b']):
        slab = slab.at[SCB_OFF + blk, :b.shape[0]].set(b)
    return slab


# ------------------------ plain-JAX reference (check) -------------------------
def reference_forward(x, p):
    def conv(h, w, b):                      # h (B, T, Ci), w (K, Ci, Co)
        K = w.shape[0]
        pad = K // 2
        hp = jnp.pad(h, ((0, 0), (pad, pad), (0, 0)))
        acc = jnp.zeros((h.shape[0], h.shape[1], w.shape[2]), jnp.float32)
        for k in range(K):
            acc = acc + jnp.einsum('btc,cd->btd', hp[:, k:k + h.shape[1], :], w[k],
                                   precision=jax.lax.Precision.HIGHEST)
        return acc + b[None, None, :]

    h = x
    sc_idx = 0
    for blk in range(3):
        w1, w2, w3 = p['conv_w'][3 * blk: 3 * blk + 3]
        b1, b2, b3 = p['conv_b'][3 * blk: 3 * blk + 3]
        ci, co = w1.shape[1], w1.shape[2]
        if ci != co:
            sc = jnp.einsum('btc,cd->btd', h, p['sc_w'][sc_idx],
                            precision=jax.lax.Precision.HIGHEST) \
                 + p['sc_b'][sc_idx][None, None, :]
            sc_idx += 1
        else:
            sc = h
        y = jnp.maximum(conv(h, w1, b1), 0.0)
        y = jnp.maximum(conv(y, w2, b2), 0.0)
        y = conv(y, w3, b3)
        h = jnp.maximum(y + sc, 0.0)
    pooled = jnp.mean(h, axis=1)                       # AdaptiveAvgPool1d(1)
    return pooled @ p['fc_w'] + p['fc_b'][None, :]     # Linear


# ------------------------------------------------------------------------------
if __name__ == "__main__":
    key = jax.random.PRNGKey(0)
    kx, kp = jax.random.split(key)
    x = jax.random.normal(kx, (B, T, C_IN), jnp.float32)
    params = make_params(kp)
    param_slab = pack_params(params)

    out = resnet_forward(x, param_slab)
    out = jax.block_until_ready(out)

    ref = reference_forward(x, params)
    assert out.shape == (B, CLASS_NUM), out.shape
    assert bool(jnp.all(jnp.isfinite(out)))
    assert bool(jnp.allclose(out, ref, rtol=3e-2, atol=3e-2)), (out, ref)

    print("KERNEL_OK")
</pallas_src>

<mosaic_0001>
module attributes {stable_mosaic.version = 11 : i64} {
  func.func @resnet_kernel(%arg0: i32, %arg1: memref<32x16xf32, #tpu.memory_space<vmem>>, %arg2: memref<504x128xf32, #tpu.memory_space<vmem>>, %arg3: memref<8x128xf32, #tpu.memory_space<vmem>>) attributes {dimension_semantics = [#tpu.dimension_semantics<arbitrary>], iteration_bounds = array<i64: 1>, scalar_prefetch = 0 : i64, scratch_operands = 0 : i64, tpu.core_type = #tpu.core_type<tc>, window_params = [{pipeline_mode = #tpu.pipeline_mode<synchronous>, transform_indices = @transform_0, window_bounds = array<i64: 32, 16>}, {pipeline_mode = #tpu.pipeline_mode<synchronous>, transform_indices = @transform_1, window_bounds = array<i64: 504, 128>}, {pipeline_mode = #tpu.pipeline_mode<synchronous>, transform_indices = @transform_2, window_bounds = array<i64: 8, 128>}]} {
    %c0 = arith.constant 0 : index
    %c0_0 = arith.constant 0 : index
    %0 = vector.load %arg1[%c0, %c0_0] : memref<32x16xf32, #tpu.memory_space<vmem>>, vector<32x16xf32>
    %1 = tpu.iota {dimensions = array<i32: 0>} : vector<32x16xi32>
    %c16_i32 = arith.constant 16 : i32
    %c0_i32 = arith.constant 0 : i32
    %2 = arith.cmpi eq, %c16_i32, %c0_i32 : i32
    %c1_i32 = arith.constant 1 : i32
    %3 = arith.select %2, %c1_i32, %c16_i32 : i32
    %4 = vector.broadcast %3 : i32 to vector<32x16xi32>
    %5 = arith.remsi %1, %4 : vector<32x16xi32>
    %c0_i32_1 = arith.constant 0 : i32
    %6 = vector.broadcast %c0_i32_1 : i32 to vector<32x16xi32>
    %7 = arith.cmpi ne, %5, %6 : vector<32x16xi32>
    %c0_i32_2 = arith.constant 0 : i32
    %8 = vector.broadcast %c0_i32_2 : i32 to vector<32x16xi32>
    %9 = arith.cmpi slt, %5, %8 : vector<32x16xi32>
    %c0_i32_3 = arith.constant 0 : i32
    %10 = arith.cmpi slt, %3, %c0_i32_3 : i32
    %11 = vector.broadcast %10 : i1 to vector<32x16xi1>
    %12 = vector.broadcast %11 : vector<32x16xi1> to vector<32x16xi1>
    %13 = arith.xori %9, %12 : vector<32x16xi1>
    %14 = arith.andi %13, %7 : vector<32x16xi1>
    %15 = vector.broadcast %3 : i32 to vector<32x16xi32>
    %16 = arith.addi %5, %15 : vector<32x16xi32>
    %17 = arith.select %14, %16, %5 : vector<32x16xi1>, vector<32x16xi32>
    %c0_i32_4 = arith.constant 0 : i32
    %18 = vector.broadcast %c0_i32_4 : i32 to vector<32x16xi32>
    %19 = arith.cmpi sgt, %17, %18 : vector<32x16xi32>
    %c15_i32 = arith.constant 15 : i32
    %20 = vector.broadcast %c15_i32 : i32 to vector<32x16xi32>
    %21 = arith.cmpi slt, %17, %20 : vector<32x16xi32>
    %cst = arith.constant 0.000000e+00 : f32
    %22 = vector.broadcast %cst : f32 to vector<32x16xf32>
    %c432 = arith.constant 432 : index
    %c0_5 = arith.constant 0 : index
    %23 = vector.load %arg2[%c432, %c0_5] : memref<504x128xf32, #tpu.memory_space<vmem>>, vector<16x16xf32>
    %c497 = arith.constant 497 : index
    %c0_6 = arith.constant 0 : index
    %24 = vector.load %arg2[%c497, %c0_6] : memref<504x128xf32, #tpu.memory_space<vmem>>, vector<1x16xf32>
    %cst_7 = arith.constant dense<0.000000e+00> : vector<32x16xf32>
    %25 = tpu.matmul %0, %23, %cst_7 {dimension_numbers = #tpu.dot_dimension_numbers<[1], [0], [0], [1], [0, 0, 1, 1], [], []>} : vector<32x16xf32>, vector<16x16xf32>, vector<32x16xf32> -> vector<32x16xf32>
    %26 = vector.broadcast %24 : vector<1x16xf32> to vector<32x16xf32>
    %27 = arith.addf %25, %26 : vector<32x16xf32>
    %c1_i32_8 = arith.constant 1 : i32
    %28 = tpu.dynamic_rotate %0 by %c1_i32_8 dim 0 : vector<32x16xf32>, i32 -> vector<32x16xf32>
    %29 = arith.select %19, %28, %22 : vector<32x16xi1>, vector<32x16xf32>
    %c31_i32 = arith.constant 31 : i32
    %30 = tpu.dynamic_rotate %0 by %c31_i32 dim 0 : vector<32x16xf32>, i32 -> vector<32x16xf32>
    %31 = arith.select %21, %30, %22 : vector<32x16xi1>, vector<32x16xf32>
    %32 = tpu.concatenate %29, %0, %31 in 1 : vector<32x16xf32>, vector<32x16xf32>, vector<32x16xf32> -> vector<32x48xf32>
    %c0_9 = arith.constant 0 : index
    %c0_10 = arith.constant 0 : index
    %33 = vector.load %arg2[%c0_9, %c0_10] : memref<504x128xf32, #tpu.memory_space<vmem>>, vector<48x16xf32>
    %c488 = arith.constant 488 : index
    %c0_11 = arith.constant 0 : index
    %34 = vector.load %arg2[%c488, %c0_11] : memref<504x128xf32, #tpu.memory_space<vmem>>, vector<1x16xf32>
    %cst_12 = arith.constant dense<0.000000e+00> : vector<32x16xf32>
    %35 = tpu.matmul %32, %33, %cst_12 {dimension_numbers = #tpu.dot_dimension_numbers<[1], [0], [0], [1], [0, 0, 1, 1], [], []>} : vector<32x48xf32>, vector<48x16xf32>, vector<32x16xf32> -> vector<32x16xf32>
    %36 = vector.broadcast %34 : vector<1x16xf32> to vector<32x16xf32>
    %37 = arith.addf %35, %36 : vector<32x16xf32>
    %cst_13 = arith.constant 0.000000e+00 : f32
    %38 = vector.broadcast %cst_13 : f32 to vector<32x16xf32>
    %39 = arith.maximumf %37, %38 : vector<32x16xf32>
    %c1_i32_14 = arith.constant 1 : i32
    %40 = tpu.dynamic_rotate %39 by %c1_i32_14 dim 0 : vector<32x16xf32>, i32 -> vector<32x16xf32>
    %41 = arith.select %19, %40, %22 : vector<32x16xi1>, vector<32x16xf32>
    %c31_i32_15 = arith.constant 31 : i32
    %42 = tpu.dynamic_rotate %39 by %c31_i32_15 dim 0 : vector<32x16xf32>, i32 -> vector<32x16xf32>
    %43 = arith.select %21, %42, %22 : vector<32x16xi1>, vector<32x16xf32>
    %44 = tpu.concatenate %41, %39, %43 in 1 : vector<32x16xf32>, vector<32x16xf32>, vector<32x16xf32> -> vector<32x48xf32>
    %c48 = arith.constant 48 : index
    %c0_16 = arith.constant 0 : index
    %45 = vector.load %arg2[%c48, %c0_16] : memref<504x128xf32, #tpu.memory_space<vmem>>, vector<48x16xf32>
    %c489 = arith.constant 489 : index
    %c0_17 = arith.constant 0 : index
    %46 = vector.load %arg2[%c489, %c0_17] : memref<504x128xf32, #tpu.memory_space<vmem>>, vector<1x16xf32>
    %cst_18 = arith.constant dense<0.000000e+00> : vector<32x16xf32>
    %47 = tpu.matmul %44, %45, %cst_18 {dimension_numbers = #tpu.dot_dimension_numbers<[1], [0], [0], [1], [0, 0, 1, 1], [], []>} : vector<32x48xf32>, vector<48x16xf32>, vector<32x16xf32> -> vector<32x16xf32>
    %48 = vector.broadcast %46 : vector<1x16xf32> to vector<32x16xf32>
    %49 = arith.addf %47, %48 : vector<32x16xf32>
    %cst_19 = arith.constant 0.000000e+00 : f32
    %50 = vector.broadcast %cst_19 : f32 to vector<32x16xf32>
    %51 = arith.maximumf %49, %50 : vector<32x16xf32>
    %c1_i32_20 = arith.constant 1 : i32
    %52 = tpu.dynamic_rotate %51 by %c1_i32_20 dim 0 : vector<32x16xf32>, i32 -> vector<32x16xf32>
    %53 = arith.select %19, %52, %22 : vector<32x16xi1>, vector<32x16xf32>
    %c31_i32_21 = arith.constant 31 : i32
    %54 = tpu.dynamic_rotate %51 by %c31_i32_21 dim 0 : vector<32x16xf32>, i32 -> vector<32x16xf32>
    %55 = arith.select %21, %54, %22 : vector<32x16xi1>, vector<32x16xf32>
    %56 = tpu.concatenate %53, %51, %55 in 1 : vector<32x16xf32>, vector<32x16xf32>, vector<32x16xf32> -> vector<32x48xf32>
    %c96 = arith.constant 96 : index
    %c0_22 = arith.constant 0 : index
    %57 = vector.load %arg2[%c96, %c0_22] : memref<504x128xf32, #tpu.memory_space<vmem>>, vector<48x16xf32>
    %c490 = arith.constant 490 : index
    %c0_23 = arith.constant 0 : index
    %58 = vector.load %arg2[%c490, %c0_23] : memref<504x128xf32, #tpu.memory_space<vmem>>, vector<1x16xf32>
    %cst_24 = arith.constant dense<0.000000e+00> : vector<32x16xf32>
    %59 = tpu.matmul %56, %57, %cst_24 {dimension_numbers = #tpu.dot_dimension_numbers<[1], [0], [0], [1], [0, 0, 1, 1], [], []>} : vector<32x48xf32>, vector<48x16xf32>, vector<32x16xf32> -> vector<32x16xf32>
    %60 = vector.broadcast %58 : vector<1x16xf32> to vector<32x16xf32>
    %61 = arith.addf %59, %60 : vector<32x16xf32>
    %62 = arith.addf %61, %27 : vector<32x16xf32>
    %cst_25 = arith.constant 0.000000e+00 : f32
    %63 = vector.broadcast %cst_25 : f32 to vector<32x16xf32>
    %64 = arith.maximumf %62, %63 : vector<32x16xf32>
    %c448 = arith.constant 448 : index
    %c0_26 = arith.constant 0 : index
    %65 = vector.load %arg2[%c448, %c0_26] : memref<504x128xf32, #tpu.memory_space<vmem>>, vector<16x16xf32>
    %c498 = arith.constant 498 : index
    %c0_27 = arith.constant 0 : index
    %66 = vector.load %arg2[%c498, %c0_27] : memref<504x128xf32, #tpu.memory_space<vmem>>, vector<1x16xf32>
    %cst_28 = arith.constant dense<0.000000e+00> : vector<32x16xf32>
    %67 = tpu.matmul %64, %65, %cst_28 {dimension_numbers = #tpu.dot_dimension_numbers<[1], [0], [0], [1], [0, 0, 1, 1], [], []>} : vector<32x16xf32>, vector<16x16xf32>, vector<32x16xf32> -> vector<32x16xf32>
    %68 = vector.broadcast %66 : vector<1x16xf32> to vector<32x16xf32>
    %69 = arith.addf %67, %68 : vector<32x16xf32>
    %c1_i32_29 = arith.constant 1 : i32
    %70 = tpu.dynamic_rotate %64 by %c1_i32_29 dim 0 : vector<32x16xf32>, i32 -> vector<32x16xf32>
    %71 = arith.select %19, %70, %22 : vector<32x16xi1>, vector<32x16xf32>
    %c31_i32_30 = arith.constant 31 : i32
    %72 = tpu.dynamic_rotate %64 by %c31_i32_30 dim 0 : vector<32x16xf32>, i32 -> vector<32x16xf32>
    %73 = arith.select %21, %72, %22 : vector<32x16xi1>, vector<32x16xf32>
    %74 = tpu.concatenate %71, %64, %73 in 1 : vector<32x16xf32>, vector<32x16xf32>, vector<32x16xf32> -> vector<32x48xf32>
    %c144 = arith.constant 144 : index
    %c0_31 = arith.constant 0 : index
    %75 = vector.load %arg2[%c144, %c0_31] : memref<504x128xf32, #tpu.memory_space<vmem>>, vector<48x16xf32>
    %c491 = arith.constant 491 : index
    %c0_32 = arith.constant 0 : index
    %76 = vector.load %arg2[%c491, %c0_32] : memref<504x128xf32, #tpu.memory_space<vmem>>, vector<1x16xf32>
    %cst_33 = arith.constant dense<0.000000e+00> : vector<32x16xf32>
    %77 = tpu.matmul %74, %75, %cst_33 {dimension_numbers = #tpu.dot_dimension_numbers<[1], [0], [0], [1], [0, 0, 1, 1], [], []>} : vector<32x48xf32>, vector<48x16xf32>, vector<32x16xf32> -> vector<32x16xf32>
    %78 = vector.broadcast %76 : vector<1x16xf32> to vector<32x16xf32>
    %79 = arith.addf %77, %78 : vector<32x16xf32>
    %cst_34 = arith.constant 0.000000e+00 : f32
    %80 = vector.broadcast %cst_34 : f32 to vector<32x16xf32>
    %81 = arith.maximumf %79, %80 : vector<32x16xf32>
    %c1_i32_35 = arith.constant 1 : i32
    %82 = tpu.dynamic_rotate %81 by %c1_i32_35 dim 0 : vector<32x16xf32>, i32 -> vector<32x16xf32>
    %83 = arith.select %19, %82, %22 : vector<32x16xi1>, vector<32x16xf32>
    %c31_i32_36 = arith.constant 31 : i32
    %84 = tpu.dynamic_rotate %81 by %c31_i32_36 dim 0 : vector<32x16xf32>, i32 -> vector<32x16xf32>
    %85 = arith.select %21, %84, %22 : vector<32x16xi1>, vector<32x16xf32>
    %86 = tpu.concatenate %83, %81, %85 in 1 : vector<32x16xf32>, vector<32x16xf32>, vector<32x16xf32> -> vector<32x48xf32>
    %c192 = arith.constant 192 : index
    %c0_37 = arith.constant 0 : index
    %87 = vector.load %arg2[%c192, %c0_37] : memref<504x128xf32, #tpu.memory_space<vmem>>, vector<48x16xf32>
    %c492 = arith.constant 492 : index
    %c0_38 = arith.constant 0 : index
    %88 = vector.load %arg2[%c492, %c0_38] : memref<504x128xf32, #tpu.memory_space<vmem>>, vector<1x16xf32>
    %cst_39 = arith.constant dense<0.000000e+00> : vector<32x16xf32>
    %89 = tpu.matmul %86, %87, %cst_39 {dimension_numbers = #tpu.dot_dimension_numbers<[1], [0], [0], [1], [0, 0, 1, 1], [], []>} : vector<32x48xf32>, vector<48x16xf32>, vector<32x16xf32> -> vector<32x16xf32>
    %90 = vector.broadcast %88 : vector<1x16xf32> to vector<32x16xf32>
    %91 = arith.addf %89, %90 : vector<32x16xf32>
    %cst_40 = arith.constant 0.000000e+00 : f32
    %92 = vector.broadcast %cst_40 : f32 to vector<32x16xf32>
    %93 = arith.maximumf %91, %92 : vector<32x16xf32>
    %c1_i32_41 = arith.constant 1 : i32
    %94 = tpu.dynamic_rotate %93 by %c1_i32_41 dim 0 : vector<32x16xf32>, i32 -> vector<32x16xf32>
    %95 = arith.select %19, %94, %22 : vector<32x16xi1>, vector<32x16xf32>
    %c31_i32_42 = arith.constant 31 : i32
    %96 = tpu.dynamic_rotate %93 by %c31_i32_42 dim 0 : vector<32x16xf32>, i32 -> vector<32x16xf32>
    %97 = arith.select %21, %96, %22 : vector<32x16xi1>, vector<32x16xf32>
    %98 = tpu.concatenate %95, %93, %97 in 1 : vector<32x16xf32>, vector<32x16xf32>, vector<32x16xf32> -> vector<32x48xf32>
    %c240 = arith.constant 240 : index
    %c0_43 = arith.constant 0 : index
    %99 = vector.load %arg2[%c240, %c0_43] : memref<504x128xf32, #tpu.memory_space<vmem>>, vector<48x16xf32>
    %c493 = arith.constant 493 : index
    %c0_44 = arith.constant 0 : index
    %100 = vector.load %arg2[%c493, %c0_44] : memref<504x128xf32, #tpu.memory_space<vmem>>, vector<1x16xf32>
    %cst_45 = arith.constant dense<0.000000e+00> : vector<32x16xf32>
    %101 = tpu.matmul %98, %99, %cst_45 {dimension_numbers = #tpu.dot_dimension_numbers<[1], [0], [0], [1], [0, 0, 1, 1], [], []>} : vector<32x48xf32>, vector<48x16xf32>, vector<32x16xf32> -> vector<32x16xf32>
    %102 = vector.broadcast %100 : vector<1x16xf32> to vector<32x16xf32>
    %103 = arith.addf %101, %102 : vector<32x16xf32>
    %104 = arith.addf %103, %69 : vector<32x16xf32>
    %cst_46 = arith.constant 0.000000e+00 : f32
    %105 = vector.broadcast %cst_46 : f32 to vector<32x16xf32>
    %106 = arith.maximumf %104, %105 : vector<32x16xf32>
    %c1_i32_47 = arith.constant 1 : i32
    %107 = tpu.dynamic_rotate %106 by %c1_i32_47 dim 0 : vector<32x16xf32>, i32 -> vector<32x16xf32>
    %108 = arith.select %19, %107, %22 : vector<32x16xi1>, vector<32x16xf32>
    %c31_i32_48 = arith.constant 31 : i32
    %109 = tpu.dynamic_rotate %106 by %c31_i32_48 dim 0 : vector<32x16xf32>, i32 -> vector<32x16xf32>
    %110 = arith.select %21, %109, %22 : vector<32x16xi1>, vector<32x16xf32>
    %111 = tpu.concatenate %108, %106, %110 in 1 : vector<32x16xf32>, vector<32x16xf32>, vector<32x16xf32> -> vector<32x48xf32>
    %c288 = arith.constant 288 : index
    %c0_49 = arith.constant 0 : index
    %112 = vector.load %arg2[%c288, %c0_49] : memref<504x128xf32, #tpu.memory_space<vmem>>, vector<48x16xf32>
    %c494 = arith.constant 494 : index
    %c0_50 = arith.constant 0 : index
    %113 = vector.load %arg2[%c494, %c0_50] : memref<504x128xf32, #tpu.memory_space<vmem>>, vector<1x16xf32>
    %cst_51 = arith.constant dense<0.000000e+00> : vector<32x16xf32>
    %114 = tpu.matmul %111, %112, %cst_51 {dimension_numbers = #tpu.dot_dimension_numbers<[1], [0], [0], [1], [0, 0, 1, 1], [], []>} : vector<32x48xf32>, vector<48x16xf32>, vector<32x16xf32> -> vector<32x16xf32>
    %115 = vector.broadcast %113 : vector<1x16xf32> to vector<32x16xf32>
    %116 = arith.addf %114, %115 : vector<32x16xf32>
    %cst_52 = arith.constant 0.000000e+00 : f32
    %117 = vector.broadcast %cst_52 : f32 to vector<32x16xf32>
    %118 = arith.maximumf %116, %117 : vector<32x16xf32>
    %c1_i32_53 = arith.constant 1 : i32
    %119 = tpu.dynamic_rotate %118 by %c1_i32_53 dim 0 : vector<32x16xf32>, i32 -> vector<32x16xf32>
    %120 = arith.select %19, %119, %22 : vector<32x16xi1>, vector<32x16xf32>
    %c31_i32_54 = arith.constant 31 : i32
    %121 = tpu.dynamic_rotate %118 by %c31_i32_54 dim 0 : vector<32x16xf32>, i32 -> vector<32x16xf32>
    %122 = arith.select %21, %121, %22 : vector<32x16xi1>, vector<32x16xf32>
    %123 = tpu.concatenate %120, %118, %122 in 1 : vector<32x16xf32>, vector<32x16xf32>, vector<32x16xf32> -> vector<32x48xf32>
    %c336 = arith.constant 336 : index
    %c0_55 = arith.constant 0 : index
    %124 = vector.load %arg2[%c336, %c0_55] : memref<504x128xf32, #tpu.memory_space<vmem>>, vector<48x16xf32>
    %c495 = arith.constant 495 : index
    %c0_56 = arith.constant 0 : index
    %125 = vector.load %arg2[%c495, %c0_56] : memref<504x128xf32, #tpu.memory_space<vmem>>, vector<1x16xf32>
    %cst_57 = arith.constant dense<0.000000e+00> : vector<32x16xf32>
    %126 = tpu.matmul %123, %124, %cst_57 {dimension_numbers = #tpu.dot_dimension_numbers<[1], [0], [0], [1], [0, 0, 1, 1], [], []>} : vector<32x48xf32>, vector<48x16xf32>, vector<32x16xf32> -> vector<32x16xf32>
    %127 = vector.broadcast %125 : vector<1x16xf32> to vector<32x16xf32>
    %128 = arith.addf %126, %127 : vector<32x16xf32>
    %cst_58 = arith.constant 0.000000e+00 : f32
    %129 = vector.broadcast %cst_58 : f32 to vector<32x16xf32>
    %130 = arith.maximumf %128, %129 : vector<32x16xf32>
    %c1_i32_59 = arith.constant 1 : i32
    %131 = tpu.dynamic_rotate %130 by %c1_i32_59 dim 0 : vector<32x16xf32>, i32 -> vector<32x16xf32>
    %132 = arith.select %19, %131, %22 : vector<32x16xi1>, vector<32x16xf32>
    %c31_i32_60 = arith.constant 31 : i32
    %133 = tpu.dynamic_rotate %130 by %c31_i32_60 dim 0 : vector<32x16xf32>, i32 -> vector<32x16xf32>
    %134 = arith.select %21, %133, %22 : vector<32x16xi1>, vector<32x16xf32>
    %135 = tpu.concatenate %132, %130, %134 in 1 : vector<32x16xf32>, vector<32x16xf32>, vector<32x16xf32> -> vector<32x48xf32>
    %c384 = arith.constant 384 : index
    %c0_61 = arith.constant 0 : index
    %136 = vector.load %arg2[%c384, %c0_61] : memref<504x128xf32, #tpu.memory_space<vmem>>, vector<48x16xf32>
    %c496 = arith.constant 496 : index
    %c0_62 = arith.constant 0 : index
    %137 = vector.load %arg2[%c496, %c0_62] : memref<504x128xf32, #tpu.memory_space<vmem>>, vector<1x16xf32>
    %cst_63 = arith.constant dense<0.000000e+00> : vector<32x16xf32>
    %138 = tpu.matmul %135, %136, %cst_63 {dimension_numbers = #tpu.dot_dimension_numbers<[1], [0], [0], [1], [0, 0, 1, 1], [], []>} : vector<32x48xf32>, vector<48x16xf32>, vector<32x16xf32> -> vector<32x16xf32>
    %139 = vector.broadcast %137 : vector<1x16xf32> to vector<32x16xf32>
    %140 = arith.addf %138, %139 : vector<32x16xf32>
    %141 = arith.addf %140, %106 : vector<32x16xf32>
    %cst_64 = arith.constant 0.000000e+00 : f32
    %142 = vector.broadcast %cst_64 : f32 to vector<32x16xf32>
    %143 = arith.maximumf %141, %142 : vector<32x16xf32>
    %c480 = arith.constant 480 : index
    %c0_65 = arith.constant 0 : index
    %144 = vector.load %arg2[%c480, %c0_65] : memref<504x128xf32, #tpu.memory_space<vmem>>, vector<8x32xf32>
    %cst_66 = arith.constant dense<0.000000e+00> : vector<8x16xf32>
    %145 = tpu.matmul %144, %143, %cst_66 {dimension_numbers = #tpu.dot_dimension_numbers<[1], [0], [0], [1], [0, 0, 1, 1], [], []>} : vector<8x32xf32>, vector<32x16xf32>, vector<8x16xf32> -> vector<8x16xf32>
    %c464 = arith.constant 464 : index
    %c0_67 = arith.constant 0 : index
    %146 = vector.load %arg2[%c464, %c0_67] : memref<504x128xf32, #tpu.memory_space<vmem>>, vector<16x128xf32>
    %c499 = arith.constant 499 : index
    %c0_68 = arith.constant 0 : index
    %147 = vector.load %arg2[%c499, %c0_68] : memref<504x128xf32, #tpu.memory_space<vmem>>, vector<1x128xf32>
    %cst_69 = arith.constant dense<0.000000e+00> : vector<8x128xf32>
    %148 = tpu.matmul %145, %146, %cst_69 {dimension_numbers = #tpu.dot_dimension_numbers<[1], [0], [0], [1], [0, 0, 1, 1], [], []>} : vector<8x16xf32>, vector<16x128xf32>, vector<8x128xf32> -> vector<8x128xf32>
    %149 = vector.broadcast %147 : vector<1x128xf32> to vector<8x128xf32>
    %150 = arith.addf %148, %149 : vector<8x128xf32>
    %c0_70 = arith.constant 0 : index
    %c0_71 = arith.constant 0 : index
    %151 = vector.load %arg3[%c0_70, %c0_71] : memref<8x128xf32, #tpu.memory_space<vmem>>, vector<8x128xf32>
    tpu.vector_store %arg3[%c0_70, %c0_71], %150 {strides = array<i32>} : memref<8x128xf32, #tpu.memory_space<vmem>>, vector<8x128xf32>,
    return
  }
  func.func @transform_0(%arg0: i32) -> (i32, i32) {
    %c0_i32 = arith.constant 0 : i32
    %c0_i32_0 = arith.constant 0 : i32
    %c0_i32_1 = arith.constant 0 : i32
    return %c0_i32, %c0_i32_0 : i32, i32
  }
  func.func @transform_1(%arg0: i32) -> (i32, i32) {
    %c0_i32 = arith.constant 0 : i32
    %c0_i32_0 = arith.constant 0 : i32
    %c0_i32_1 = arith.constant 0 : i32
    return %c0_i32, %c0_i32_0 : i32, i32
  }
  func.func @transform_2(%arg0: i32) -> (i32, i32) {
    %c0_i32 = arith.constant 0 : i32
    %c0_i32_0 = arith.constant 0 : i32
    %c0_i32_1 = arith.constant 0 : i32
    return %c0_i32, %c0_i32_0 : i32, i32
  }
}

</mosaic_0001>

<llo_original>
// kernel: tpu_custom_call.1
$region0: #{tpu_custom_call.1}
  #allocation0 [shape = 'u32[]', space=smem, size = 0x4, offset = 0x4, fixed_abs, tag = 'smem constant byte address 0x4 - core index']
  #allocation1 [shape = 'u32[144,128]{1,0:T(1,128)}', space=vmem, size = 0x12000, scoped, tag = 'internal scratch']
  %s0 = inlined_call_operand.vmem [shape: f32[32,16], index: 0, kind: input, shape index: {}]
  %s1 = inlined_call_operand.hbm [shape: f32[504,128], index: 1, kind: input, shape index: {}]
  %s2 = inlined_call_operand.hbm [shape: f32[8,128], index: 2, kind: output, shape index: {}]
  %s3 = sld [smem:[#allocation0]]
  $region22: #{tpu_custom_call.1} parent=0
    _
  %s5 = ssub.s32 1, %s3
  %s6 = scalar_select 0, %s5, %s3
  $region1: #{tpu_custom_call.1} parent=0
    #allocation2 [shape = 'u8[258048]{0}', space=vmem, size = 0x3f000, scoped, tag = 'input window, operand 1, single buffered']
    #allocation3 [shape = 's32[1]{0}', space=sflag, size = 0x4, scoped, tag = 'scoped memory for tpu_custom_call.1']
    #allocation4 [shape = 's32[1]{0}', space=sflag, size = 0x4, scoped, tag = 'scoped memory for tpu_custom_call.1']
    #allocation5 [shape = 'u8[4096]{0}', space=vmem, size = 0x1000, scoped, tag = 'output window, operand 0, single buffered']
    %7 = vsyncpa [#allocation3], 0
    %8 = vsyncpa [#allocation4], 0
    // Predicated region
    $region2: #{tpu_custom_call.1} parent=1 // pred_check
      _
    $region3: #{tpu_custom_call.1} parent=1 // pred_check_branch
      %10 = sbr.rel (0) target = $region5
    $region4: #{tpu_custom_call.1} parent=1 // pred_region
      _
    $region5: #{tpu_custom_call.1} parent=1 // pred_fallthru
      _
    // Predicated region
    $region6: #{tpu_custom_call.1} parent=1 // pred_check
      _
    $region7: #{tpu_custom_call.1} parent=1 // pred_check_branch
      %12 = sbr.rel (0) target = $region9
    $region8: #{tpu_custom_call.1} parent=1 // pred_region
      %s14 = ssub.s32 8064, 8064
      %15 = vsyncadd [#allocation3], %s14
      %s16 = sshll.u32 [#allocation2], 4
      %s17 = int_to_ptr.vmem [resolvable:$true] %s16
      %22 = dma.hbm_to_vmem [thread:$0]  %s1, 8064, %s17, [#allocation3], 128, 128, 8
    $region9: #{tpu_custom_call.1} parent=1 // pred_fallthru
      _
    // Predicated region
    $region10: #{tpu_custom_call.1} parent=1 // pred_check
      _
    $region11: #{tpu_custom_call.1} parent=1 // pred_check_branch
      %24 = sbr.rel (0) target = $region13
    $region12: #{tpu_custom_call.1} parent=1 // pred_region
      %25 = dma.done [#allocation3], 8064
    $region13: #{tpu_custom_call.1} parent=1 // pred_fallthru
      _
    %v26 = vld [vmem:[%s0] sm:$0xff]
    %v27 = vld [vmem:[%s0 + $0x8] sm:$0xff]
    %v28 = vld [vmem:[%s0 + $0x10] sm:$0xff]
    %v29 = vld [vmem:[%s0 + $0x18] sm:$0xff]
    %v30 = vlaneseq
    %v31 = vshrl.u32 %v30, 7
    %v32 = vadd.s32 %v31, 8
    %v33 = vadd.s32 %v31, 16
    %v34 = vadd.s32 %v31, 24
    %vm35 = vcmp.lt.s32.totalorder %v31, 0
    %v36 = vsub.s32 0, %v31
    %v37 = vsel %vm35, %v36, %v31
    %v38 = vshrl.u32 %v37, 4
    %v39 = vand.u32 %v37, 15
    %v40 = vsub.s32 0, %v39
    %v41 = vsel %vm35, %v40, %v39
    %vm42 = vcmp.lt.s32.totalorder %v32, 0
    %v43 = vsub.s32 0, %v32
    %v44 = vsel %vm42, %v43, %v32
    %v45 = vshrl.u32 %v44, 4
    %v46 = vand.u32 %v44, 15
    %v47 = vsub.s32 0, %v46
    %v48 = vsel %vm42, %v47, %v46
    %vm49 = vcmp.lt.s32.totalorder %v33, 0
    %v50 = vsub.s32 0, %v33
    %v51 = vsel %vm49, %v50, %v33
    %v52 = vshrl.u32 %v51, 4
    %v53 = vand.u32 %v51, 15
    %v54 = vsub.s32 0, %v53
    %v55 = vsel %vm49, %v54, %v53
    %vm56 = vcmp.lt.s32.totalorder %v34, 0
    %v57 = vsub.s32 0, %v34
    %v58 = vsel %vm56, %v57, %v34
    %v59 = vshrl.u32 %v58, 4
    %v60 = vand.u32 %v58, 15
    %v61 = vsub.s32 0, %v60
    %v62 = vsel %vm56, %v61, %v60
    %vm63 = vcmp.ne.s32.totalorder %v41, 0
    %vm64 = vcmp.ne.s32.totalorder %v48, 0
    %vm65 = vcmp.ne.s32.totalorder %v55, 0
    %vm66 = vcmp.ne.s32.totalorder %v62, 0
    %vm67 = vcmp.lt.s32.totalorder %v41, 0
    %vm68 = vcmp.lt.s32.totalorder %v48, 0
    %vm69 = vcmp.lt.s32.totalorder %v55, 0
    %vm70 = vcmp.lt.s32.totalorder %v62, 0
    %vm71 = vmand %vm67, %vm63
    %vm72 = vmand %vm68, %vm64
    %vm73 = vmand %vm69, %vm65
    %vm74 = vmand %vm70, %vm66
    %v75 = vadd.s32 %v41, 16
    %v76 = vadd.s32 %v48, 16
    %v77 = vadd.s32 %v55, 16
    %v78 = vadd.s32 %v62, 16
    %v79 = vsel %vm71, %v75, %v41
    %v80 = vsel %vm72, %v76, %v48
    %v81 = vsel %vm73, %v77, %v55
    %v82 = vsel %vm74, %v78, %v62
    %vm83 = vcmp.gt.s32.totalorder %v79, 0
    %vm84 = vcmp.gt.s32.totalorder %v80, 0
    %vm85 = vcmp.gt.s32.totalorder %v81, 0
    %vm86 = vcmp.gt.s32.totalorder %v82, 0
    %vm87 = vcmp.lt.s32.totalorder %v79, 15
    %vm88 = vcmp.lt.s32.totalorder %v80, 15
    %vm89 = vcmp.lt.s32.totalorder %v81, 15
    %vm90 = vcmp.lt.s32.totalorder %v82, 15
    %v91 = vld [vmem:[#allocation2 + $0x1b0] sm:$0xff]
    %v92 = vld [vmem:[#allocation2 + $0x1b8] sm:$0xff]
    %v93 = vld [vmem:[#allocation2 + $0x1f1] sm:$0x1]
    %v94 = vlaneseq
    %v95 = vshrl.u32 %v94, 7
    %v96 = vsub.s32 0, %v95
    %v97 = vrot.slane %v93, %v96
    %vm98 = vcmask 130048
    %v100 = vsel %vm98, %v26, 0
    %v103 = vsel %vm98, %v27, 0
    %v106 = vsel %vm98, %v28, 0
    %v109 = vsel %vm98, %v29, 0
    %111 = vmatprep.subr.mxu0 0.0
    %112 = vmatpush1.msra.mxu0 0.0
    %113 = vmatprep.subr.mxu0 0.0
    %114 = vmatpush1.msra.mxu0 0.0
    %115 = vmatprep.subr.mxu0 0.0
    %116 = vmatpush1.msra.mxu0 0.0
    %117 = vmatprep.subr.mxu0 0.0
    %118 = vmatpush1.msra.mxu0 0.0
    %119 = vmatprep.subr.mxu0 0.0
    %120 = vmatpush1.msra.mxu0 0.0
    %121 = vmatprep.subr.mxu0 0.0
    %122 = vmatpush1.msra.mxu0 0.0
    %123 = vmatprep.subr.mxu0 0.0
    %124 = vmatpush1.msra.mxu0 0.0
    %125 = vmatprep.subr.mxu0 0.0
    %126 = vmatpush1.msra.mxu0 0.0
    %127 = vmatprep.subr.mxu0 0.0
    %128 = vmatpush1.msra.mxu0 0.0
    %129 = vmatprep.subr.mxu0 0.0
    %130 = vmatpush1.msra.mxu0 0.0
    %131 = vmatprep.subr.mxu0 0.0
    %132 = vmatpush1.msra.mxu0 0.0
    %133 = vmatprep.subr.mxu0 0.0
    %134 = vmatpush1.msra.mxu0 0.0
    %135 = vmatprep.subr.mxu0 0.0
    %136 = vmatpush1.msra.mxu0 0.0
    %137 = vmatprep.subr.mxu0 0.0
    %138 = vmatpush1.msra.mxu0 0.0
    %139 = vmatprep.subr.mxu0 0.0
    %140 = vmatpush1.msra.mxu0 %v92
    %141 = vmatprep.subr.mxu0 0.0
    %142 = vmatpush1.msra.mxu0 %v91
    %143 = vmatprep.subr.mxu0 0.0
    %144 = vmatpush2.msra.mxu0 0.0
    %145 = vmatprep.subr.mxu0 0.0
    %146 = vmatpush2.msra.mxu0 0.0
    %147 = vmatprep.subr.mxu0 0.0
    %148 = vmatpush2.msra.mxu0 0.0
    %149 = vmatprep.subr.mxu0 0.0
    %150 = vmatpush2.msra.mxu0 0.0
    %151 = vmatprep.subr.mxu0 0.0
    %152 = vmatpush2.msra.mxu0 0.0
    %153 = vmatprep.subr.mxu0 0.0
    %154 = vmatpush2.msra.mxu0 0.0
    %155 = vmatprep.subr.mxu0 0.0
    %156 = vmatpush2.msra.mxu0 0.0
    %157 = vmatprep.subr.mxu0 0.0
    %158 = vmatpush2.msra.mxu0 0.0
    %159 = vmatprep.subr.mxu0 0.0
    %160 = vmatpush2.msra.mxu0 0.0
    %161 = vmatprep.subr.mxu0 0.0
    %162 = vmatpush2.msra.mxu0 0.0
    %163 = vmatprep.subr.mxu0 0.0
    %164 = vmatpush2.msra.mxu0 0.0
    %165 = vmatprep.subr.mxu0 0.0
    %166 = vmatpush2.msra.mxu0 0.0
    %167 = vmatprep.subr.mxu0 0.0
    %168 = vmatpush2.msra.mxu0 0.0
    %169 = vmatprep.subr.mxu0 0.0
    %170 = vmatpush2.msra.mxu0 0.0
    %171 = vmatprep.subr.mxu0 0.0
    %172 = vmatpush2.msra.mxu0 0.0
    %173 = vmatprep.subr.mxu0 0.0
    %174 = vmatpush2.msra.mxu0 0.0
    %175 = vmatprep.mubr.f32.mxu0 0.0
    %176 = vmatmul.mubr.f32.gmra.mxu0 %v100
    %v177 = vpop.f32.mrf.mxu0
    %v178 = vadd.f32 %v97, %v177
    %v179 = vpop.f32.mrf.mxu0
    %180 = vmatprep.mubr.f32.mxu0 0.0
    %181 = vmatmul.mubr.f32.gmra.mxu0 %v103
    %v182 = vpop.f32.mrf.mxu0
    %v183 = vadd.f32 %v97, %v182
    %v184 = vpop.f32.mrf.mxu0
    %185 = vmatprep.mubr.f32.mxu0 0.0
    %186 = vmatmul.mubr.f32.gmra.mxu0 %v106
    %v187 = vpop.f32.mrf.mxu0
    %v188 = vadd.f32 %v97, %v187
    %v189 = vpop.f32.mrf.mxu0
    %190 = vmatprep.mubr.f32.mxu0 0.0
    %191 = vmatmul.mubr.f32.gmra.mxu0 %v109
    %v192 = vpop.f32.mrf.mxu0
    %v193 = vadd.f32 %v97, %v192
    %v194 = vpop.f32.mrf.mxu0
    %195 = vdwg.mxu0
    %v196 = vrot.slane %v26, 7
    %v197 = vrot.slane %v27, 7
    %v198 = vrot.slane %v28, 7
    %v199 = vrot.slane %v29, 7
    %vm200 = vcmp.lt.s32.totalorder %v31, 1
    %v201 = vsel %vm200, %v198, %v199
    %v202 = vsel %vm200, %v197, %v198
    %v203 = vsel %vm200, %v196, %v197
    %v204 = vsel %vm200, %v199, %v196
    %v205 = vsel %vm83, %v204, 0.0
    %v206 = vsel %vm84, %v203, 0.0
    %v207 = vsel %vm85, %v202, 0.0
    %v208 = vsel %vm86, %v201, 0.0
    %v209 = vrot.slane %v26, 1
    %v210 = vrot.slane %v27, 1
    %v211 = vrot.slane %v28, 1
    %v212 = vrot.slane %v29, 1
    %vm213 = vcmp.lt.s32.totalorder %v31, 7
    %v214 = vsel %vm213, %v211, %v212
    %v215 = vsel %vm213, %v210, %v211
    %v216 = vsel %vm213, %v209, %v210
    %v217 = vsel %vm213, %v212, %v209
    %v218 = vsel %vm87, %v216, 0.0
    %v219 = vsel %vm88, %v215, 0.0
    %v220 = vsel %vm89, %v214, 0.0
    %v221 = vsel %vm90, %v217, 0.0
    %222 = vrot.lane.b32.xlu0 %v26, 16
    %v223 = vpop.permute.xlu0 %222
    %224 = vrot.lane.b32.xlu0 %v27, 16
    %v225 = vpop.permute.xlu0 %224
    %226 = vrot.lane.b32.xlu0 %v28, 16
    %v227 = vpop.permute.xlu0 %226
    %228 = vrot.lane.b32.xlu0 %v29, 16
    %v229 = vpop.permute.xlu0 %228
    %238 = vrot.lane.b32.xlu0 %v218, 32
    %v239 = vpop.permute.xlu0 %238
    %240 = vrot.lane.b32.xlu0 %v219, 32
    %v241 = vpop.permute.xlu0 %240
    %242 = vrot.lane.b32.xlu0 %v220, 32
    %v243 = vpop.permute.xlu0 %242
    %244 = vrot.lane.b32.xlu0 %v221, 32
    %v245 = vpop.permute.xlu0 %244
    %v250 = vsel %vm98, %v205, %v223
    %v251 = vsel %vm98, %v206, %v225
    %v252 = vsel %vm98, %v207, %v227
    %v253 = vsel %vm98, %v208, %v229
    %vm254 = vcmask 261120
    %v255 = vsel %vm254, %v250, %v239
    %v256 = vsel %vm254, %v251, %v241
    %v257 = vsel %vm254, %v252, %v243
    %v258 = vsel %vm254, %v253, %v245
    %v259 = vld [vmem:[#allocation2] sm:$0xff]
    %v260 = vld [vmem:[#allocation2 + $0x8] sm:$0xff]
    %v261 = vld [vmem:[#allocation2 + $0x10] sm:$0xff]
    %v262 = vld [vmem:[#allocation2 + $0x18] sm:$0xff]
    %v263 = vld [vmem:[#allocation2 + $0x20] sm:$0xff]
    %v264 = vld [vmem:[#allocation2 + $0x28] sm:$0xff]
    %v265 = vld [vmem:[#allocation2 + $0x1e8] sm:$0x1]
    %v266 = vlaneseq
    %v267 = vshrl.u32 %v266, 7
    %v268 = vsub.s32 0, %v267
    %v269 = vrot.slane %v265, %v268
    %vm270 = vcmask 392192
    %v272 = vsel %vm270, %v255, 0
    %v275 = vsel %vm270, %v256, 0
    %v278 = vsel %vm270, %v257, 0
    %v281 = vsel %vm270, %v258, 0
    %283 = vmatprep.subr.mxu0 0.0
    %284 = vmatpush1.msra.mxu0 0.0
    %285 = vmatprep.subr.mxu0 0.0
    %286 = vmatpush1.msra.mxu0 0.0
    %287 = vmatprep.subr.mxu0 0.0
    %288 = vmatpush1.msra.mxu0 0.0
    %289 = vmatprep.subr.mxu0 0.0
    %290 = vmatpush1.msra.mxu0 0.0
    %291 = vmatprep.subr.mxu0 0.0
    %292 = vmatpush1.msra.mxu0 0.0
    %293 = vmatprep.subr.mxu0 0.0
    %294 = vmatpush1.msra.mxu0 0.0
    %295 = vmatprep.subr.mxu0 0.0
    %296 = vmatpush1.msra.mxu0 0.0
    %297 = vmatprep.subr.mxu0 0.0
    %298 = vmatpush1.msra.mxu0 0.0
    %299 = vmatprep.subr.mxu0 0.0
    %300 = vmatpush1.msra.mxu0 0.0
    %301 = vmatprep.subr.mxu0 0.0
    %302 = vmatpush1.msra.mxu0 0.0
    %303 = vmatprep.subr.mxu0 0.0
    %304 = vmatpush1.msra.mxu0 %v264
    %305 = vmatprep.subr.mxu0 0.0
    %306 = vmatpush1.msra.mxu0 %v263
    %307 = vmatprep.subr.mxu0 0.0
    %308 = vmatpush1.msra.mxu0 %v262
    %309 = vmatprep.subr.mxu0 0.0
    %310 = vmatpush1.msra.mxu0 %v261
    %311 = vmatprep.subr.mxu0 0.0
    %312 = vmatpush1.msra.mxu0 %v260
    %313 = vmatprep.subr.mxu0 0.0
    %314 = vmatpush1.msra.mxu0 %v259
    %315 = vmatprep.subr.mxu0 0.0
    %316 = vmatpush2.msra.mxu0 0.0
    %317 = vmatprep.subr.mxu0 0.0
    %318 = vmatpush2.msra.mxu0 0.0
    %319 = vmatprep.subr.mxu0 0.0
    %320 = vmatpush2.msra.mxu0 0.0
    %321 = vmatprep.subr.mxu0 0.0
    %322 = vmatpush2.msra.mxu0 0.0
    %323 = vmatprep.subr.mxu0 0.0
    %324 = vmatpush2.msra.mxu0 0.0
    %325 = vmatprep.subr.mxu0 0.0
    %326 = vmatpush2.msra.mxu0 0.0
    %327 = vmatprep.subr.mxu0 0.0
    %328 = vmatpush2.msra.mxu0 0.0
    %329 = vmatprep.subr.mxu0 0.0
    %330 = vmatpush2.msra.mxu0 0.0
    %331 = vmatprep.subr.mxu0 0.0
    %332 = vmatpush2.msra.mxu0 0.0
    %333 = vmatprep.subr.mxu0 0.0
    %334 = vmatpush2.msra.mxu0 0.0
    %335 = vmatprep.subr.mxu0 0.0
    %336 = vmatpush2.msra.mxu0 0.0
    %337 = vmatprep.subr.mxu0 0.0
    %338 = vmatpush2.msra.mxu0 0.0
    %339 = vmatprep.subr.mxu0 0.0
    %340 = vmatpush2.msra.mxu0 0.0
    %341 = vmatprep.subr.mxu0 0.0
    %342 = vmatpush2.msra.mxu0 0.0
    %343 = vmatprep.subr.mxu0 0.0
    %344 = vmatpush2.msra.mxu0 0.0
    %345 = vmatprep.subr.mxu0 0.0
    %346 = vmatpush2.msra.mxu0 0.0
    %347 = vmatprep.mubr.f32.mxu0 0.0
    %348 = vmatmul.mubr.f32.gmra.mxu0 %v272
    %v349 = vpop.f32.mrf.mxu0
    %v350 = vadd.f32 %v269, %v349
    %v351 = vpop.f32.mrf.mxu0
    %352 = vmatprep.mubr.f32.mxu0 0.0
    %353 = vmatmul.mubr.f32.gmra.mxu0 %v275
    %v354 = vpop.f32.mrf.mxu0
    %v355 = vadd.f32 %v269, %v354
    %v356 = vpop.f32.mrf.mxu0
    %357 = vmatprep.mubr.f32.mxu0 0.0
    %358 = vmatmul.mubr.f32.gmra.mxu0 %v278
    %v359 = vpop.f32.mrf.mxu0
    %v360 = vadd.f32 %v269, %v359
    %v361 = vpop.f32.mrf.mxu0
    %362 = vmatprep.mubr.f32.mxu0 0.0
    %363 = vmatmul.mubr.f32.gmra.mxu0 %v281
    %v364 = vpop.f32.mrf.mxu0
    %v365 = vadd.f32 %v269, %v364
    %v366 = vpop.f32.mrf.mxu0
    %367 = vdwg.mxu0
    %v368 = vmax.f32 %v350, 0.0
    %v369 = vmax.f32 %v355, 0.0
    %v370 = vmax.f32 %v360, 0.0
    %v371 = vmax.f32 %v365, 0.0
    %v372 = vrot.slane %v368, 7
    %v373 = vrot.slane %v369, 7
    %v374 = vrot.slane %v370, 7
    %v375 = vrot.slane %v371, 7
    %v376 = vsel %vm200, %v374, %v375
    %v377 = vsel %vm200, %v373, %v374
    %v378 = vsel %vm200, %v372, %v373
    %v379 = vsel %vm200, %v375, %v372
    %v380 = vsel %vm83, %v379, 0.0
    %v381 = vsel %vm84, %v378, 0.0
    %v382 = vsel %vm85, %v377, 0.0
    %v383 = vsel %vm86, %v376, 0.0
    %v384 = vrot.slane %v368, 1
    %v385 = vrot.slane %v369, 1
    %v386 = vrot.slane %v370, 1
    %v387 = vrot.slane %v371, 1
    %v388 = vsel %vm213, %v386, %v387
    %v389 = vsel %vm213, %v385, %v386
    %v390 = vsel %vm213, %v384, %v385
    %v391 = vsel %vm213, %v387, %v384
    %v392 = vsel %vm87, %v390, 0.0
    %v393 = vsel %vm88, %v389, 0.0
    %v394 = vsel %vm89, %v388, 0.0
    %v395 = vsel %vm90, %v391, 0.0
    %400 = vrot.lane.b32.xlu0 %v368, 16
    %v401 = vpop.permute.xlu0 %400
    %402 = vrot.lane.b32.xlu0 %v369, 16
    %v403 = vpop.permute.xlu0 %402
    %404 = vrot.lane.b32.xlu0 %v370, 16
    %v405 = vpop.permute.xlu0 %404
    %406 = vrot.lane.b32.xlu0 %v371, 16
    %v407 = vpop.permute.xlu0 %406
    %416 = vrot.lane.b32.xlu0 %v392, 32
    %v417 = vpop.permute.xlu0 %416
    %418 = vrot.lane.b32.xlu0 %v393, 32
    %v419 = vpop.permute.xlu0 %418
    %420 = vrot.lane.b32.xlu0 %v394, 32
    %v421 = vpop.permute.xlu0 %420
    %422 = vrot.lane.b32.xlu0 %v395, 32
    %v423 = vpop.permute.xlu0 %422
    %v428 = vsel %vm98, %v380, %v401
    %v429 = vsel %vm98, %v381, %v403
    %v430 = vsel %vm98, %v382, %v405
    %v431 = vsel %vm98, %v383, %v407
    %v432 = vsel %vm254, %v428, %v417
    %v433 = vsel %vm254, %v429, %v419
    %v434 = vsel %vm254, %v430, %v421
    %v435 = vsel %vm254, %v431, %v423
    %v436 = vld [vmem:[#allocation2 + $0x30] sm:$0xff]
    %v437 = vld [vmem:[#allocation2 + $0x38] sm:$0xff]
    %v438 = vld [vmem:[#allocation2 + $0x40] sm:$0xff]
    %v439 = vld [vmem:[#allocation2 + $0x48] sm:$0xff]
    %v440 = vld [vmem:[#allocation2 + $0x50] sm:$0xff]
    %v441 = vld [vmem:[#allocation2 + $0x58] sm:$0xff]
    %v442 = vld [vmem:[#allocation2 + $0x1e9] sm:$0x1]
    %v443 = vlaneseq
    %v444 = vshrl.u32 %v443, 7
    %v445 = vsub.s32 0, %v444
    %v446 = vrot.slane %v442, %v445
    %v448 = vsel %vm270, %v432, 0
    %v451 = vsel %vm270, %v433, 0
    %v454 = vsel %vm270, %v434, 0
    %v457 = vsel %vm270, %v435, 0
    %459 = vmatprep.subr.mxu0 0.0
    %460 = vmatpush1.msra.mxu0 0.0
    %461 = vmatprep.subr.mxu0 0.0
    %462 = vmatpush1.msra.mxu0 0.0
    %463 = vmatprep.subr.mxu0 0.0
    %464 = vmatpush1.msra.mxu0 0.0
    %465 = vmatprep.subr.mxu0 0.0
    %466 = vmatpush1.msra.mxu0 0.0
    %467 = vmatprep.subr.mxu0 0.0
    %468 = vmatpush1.msra.mxu0 0.0
    %469 = vmatprep.subr.mxu0 0.0
    %470 = vmatpush1.msra.mxu0 0.0
    %471 = vmatprep.subr.mxu0 0.0
    %472 = vmatpush1.msra.mxu0 0.0
    %473 = vmatprep.subr.mxu0 0.0
    %474 = vmatpush1.msra.mxu0 0.0
    %475 = vmatprep.subr.mxu0 0.0
    %476 = vmatpush1.msra.mxu0 0.0
    %477 = vmatprep.subr.mxu0 0.0
    %478 = vmatpush1.msra.mxu0 0.0
    %479 = vmatprep.subr.mxu0 0.0
    %480 = vmatpush1.msra.mxu0 %v441
    %481 = vmatprep.subr.mxu0 0.0
    %482 = vmatpush1.msra.mxu0 %v440
    %483 = vmatprep.subr.mxu0 0.0
    %484 = vmatpush1.msra.mxu0 %v439
    %485 = vmatprep.subr.mxu0 0.0
    %486 = vmatpush1.msra.mxu0 %v438
    %487 = vmatprep.subr.mxu0 0.0
    %488 = vmatpush1.msra.mxu0 %v437
    %489 = vmatprep.subr.mxu0 0.0
    %490 = vmatpush1.msra.mxu0 %v436
    %491 = vmatprep.subr.mxu0 0.0
    %492 = vmatpush2.msra.mxu0 0.0
    %493 = vmatprep.subr.mxu0 0.0
    %494 = vmatpush2.msra.mxu0 0.0
    %495 = vmatprep.subr.mxu0 0.0
    %496 = vmatpush2.msra.mxu0 0.0
    %497 = vmatprep.subr.mxu0 0.0
    %498 = vmatpush2.msra.mxu0 0.0
    %499 = vmatprep.subr.mxu0 0.0
    %500 = vmatpush2.msra.mxu0 0.0
    %501 = vmatprep.subr.mxu0 0.0
    %502 = vmatpush2.msra.mxu0 0.0
    %503 = vmatprep.subr.mxu0 0.0
    %504 = vmatpush2.msra.mxu0 0.0
    %505 = vmatprep.subr.mxu0 0.0
    %506 = vmatpush2.msra.mxu0 0.0
    %507 = vmatprep.subr.mxu0 0.0
    %508 = vmatpush2.msra.mxu0 0.0
    %509 = vmatprep.subr.mxu0 0.0
    %510 = vmatpush2.msra.mxu0 0.0
    %511 = vmatprep.subr.mxu0 0.0
    %512 = vmatpush2.msra.mxu0 0.0
    %513 = vmatprep.subr.mxu0 0.0
    %514 = vmatpush2.msra.mxu0 0.0
    %515 = vmatprep.subr.mxu0 0.0
    %516 = vmatpush2.msra.mxu0 0.0
    %517 = vmatprep.subr.mxu0 0.0
    %518 = vmatpush2.msra.mxu0 0.0
    %519 = vmatprep.subr.mxu0 0.0
    %520 = vmatpush2.msra.mxu0 0.0
    %521 = vmatprep.subr.mxu0 0.0
    %522 = vmatpush2.msra.mxu0 0.0
    %523 = vmatprep.mubr.f32.mxu0 0.0
    %524 = vmatmul.mubr.f32.gmra.mxu0 %v448
    %v525 = vpop.f32.mrf.mxu0
    %v526 = vadd.f32 %v446, %v525
    %v527 = vpop.f32.mrf.mxu0
    %528 = vmatprep.mubr.f32.mxu0 0.0
    %529 = vmatmul.mubr.f32.gmra.mxu0 %v451
    %v530 = vpop.f32.mrf.mxu0
    %v531 = vadd.f32 %v446, %v530
    %v532 = vpop.f32.mrf.mxu0
    %533 = vmatprep.mubr.f32.mxu0 0.0
    %534 = vmatmul.mubr.f32.gmra.mxu0 %v454
    %v535 = vpop.f32.mrf.mxu0
    %v536 = vadd.f32 %v446, %v535
    %v537 = vpop.f32.mrf.mxu0
    %538 = vmatprep.mubr.f32.mxu0 0.0
    %539 = vmatmul.mubr.f32.gmra.mxu0 %v457
    %v540 = vpop.f32.mrf.mxu0
    %v541 = vadd.f32 %v446, %v540
    %v542 = vpop.f32.mrf.mxu0
    %543 = vdwg.mxu0
    %v544 = vmax.f32 %v526, 0.0
    %v545 = vmax.f32 %v531, 0.0
    %v546 = vmax.f32 %v536, 0.0
    %v547 = vmax.f32 %v541, 0.0
    %v548 = vrot.slane %v544, 7
    %v549 = vrot.slane %v545, 7
    %v550 = vrot.slane %v546, 7
    %v551 = vrot.slane %v547, 7
    %v552 = vsel %vm200, %v550, %v551
    %v553 = vsel %vm200, %v549, %v550
    %v554 = vsel %vm200, %v548, %v549
    %v555 = vsel %vm200, %v551, %v548
    %v556 = vsel %vm83, %v555, 0.0
    %v557 = vsel %vm84, %v554, 0.0
    %v558 = vsel %vm85, %v553, 0.0
    %v559 = vsel %vm86, %v552, 0.0
    %v560 = vrot.slane %v544, 1
    %v561 = vrot.slane %v545, 1
    %v562 = vrot.slane %v546, 1
    %v563 = vrot.slane %v547, 1
    %v564 = vsel %vm213, %v562, %v563
    %v565 = vsel %vm213, %v561, %v562
    %v566 = vsel %vm213, %v560, %v561
    %v567 = vsel %vm213, %v563, %v560
    %v568 = vsel %vm87, %v566, 0.0
    %v569 = vsel %vm88, %v565, 0.0
    %v570 = vsel %vm89, %v564, 0.0
    %v571 = vsel %vm90, %v567, 0.0
    %576 = vrot.lane.b32.xlu0 %v544, 16
    %v577 = vpop.permute.xlu0 %576
    %578 = vrot.lane.b32.xlu0 %v545, 16
    %v579 = vpop.permute.xlu0 %578
    %580 = vrot.lane.b32.xlu0 %v546, 16
    %v581 = vpop.permute.xlu0 %580
    %582 = vrot.lane.b32.xlu0 %v547, 16
    %v583 = vpop.permute.xlu0 %582
    %592 = vrot.lane.b32.xlu0 %v568, 32
    %v593 = vpop.permute.xlu0 %592
    %594 = vrot.lane.b32.xlu0 %v569, 32
    %v595 = vpop.permute.xlu0 %594
    %596 = vrot.lane.b32.xlu0 %v570, 32
    %v597 = vpop.permute.xlu0 %596
    %598 = vrot.lane.b32.xlu0 %v571, 32
    %v599 = vpop.permute.xlu0 %598
    %v604 = vsel %vm98, %v556, %v577
    %v605 = vsel %vm98, %v557, %v579
    %v606 = vsel %vm98, %v558, %v581
    %v607 = vsel %vm98, %v559, %v583
    %v608 = vsel %vm254, %v604, %v593
    %v609 = vsel %vm254, %v605, %v595
    %v610 = vsel %vm254, %v606, %v597
    %v611 = vsel %vm254, %v607, %v599
    %v612 = vld [vmem:[#allocation2 + $0x60] sm:$0xff]
    %v613 = vld [vmem:[#allocation2 + $0x68] sm:$0xff]
    %v614 = vld [vmem:[#allocation2 + $0x70] sm:$0xff]
    %v615 = vld [vmem:[#allocation2 + $0x78] sm:$0xff]
    %v616 = vld [vmem:[#allocation2 + $0x80] sm:$0xff]
    %v617 = vld [vmem:[#allocation2 + $0x88] sm:$0xff]
    %v618 = vld [vmem:[#allocation2 + $0x1ea] sm:$0x1]
    %v619 = vlaneseq
    %v620 = vshrl.u32 %v619, 7
    %v621 = vsub.s32 0, %v620
    %v622 = vrot.slane %v618, %v621
    %v624 = vsel %vm270, %v608, 0
    %v627 = vsel %vm270, %v609, 0
    %v630 = vsel %vm270, %v610, 0
    %v633 = vsel %vm270, %v611, 0
    %635 = vmatprep.subr.mxu0 0.0
    %636 = vmatpush1.msra.mxu0 0.0
    %637 = vmatprep.subr.mxu0 0.0
    %638 = vmatpush1.msra.mxu0 0.0
    %639 = vmatprep.subr.mxu0 0.0
    %640 = vmatpush1.msra.mxu0 0.0
    %641 = vmatprep.subr.mxu0 0.0
    %642 = vmatpush1.msra.mxu0 0.0
    %643 = vmatprep.subr.mxu0 0.0
    %644 = vmatpush1.msra.mxu0 0.0
    %645 = vmatprep.subr.mxu0 0.0
    %646 = vmatpush1.msra.mxu0 0.0
    %647 = vmatprep.subr.mxu0 0.0
    %648 = vmatpush1.msra.mxu0 0.0
    %649 = vmatprep.subr.mxu0 0.0
    %650 = vmatpush1.msra.mxu0 0.0
    %651 = vmatprep.subr.mxu0 0.0
    %652 = vmatpush1.msra.mxu0 0.0
    %653 = vmatprep.subr.mxu0 0.0
    %654 = vmatpush1.msra.mxu0 0.0
    %655 = vmatprep.subr.mxu0 0.0
    %656 = vmatpush1.msra.mxu0 %v617
    %657 = vmatprep.subr.mxu0 0.0
    %658 = vmatpush1.msra.mxu0 %v616
    %659 = vmatprep.subr.mxu0 0.0
    %660 = vmatpush1.msra.mxu0 %v615
    %661 = vmatprep.subr.mxu0 0.0
    %662 = vmatpush1.msra.mxu0 %v614
    %663 = vmatprep.subr.mxu0 0.0
    %664 = vmatpush1.msra.mxu0 %v613
    %665 = vmatprep.subr.mxu0 0.0
    %666 = vmatpush1.msra.mxu0 %v612
    %667 = vmatprep.subr.mxu0 0.0
    %668 = vmatpush2.msra.mxu0 0.0
    %669 = vmatprep.subr.mxu0 0.0
    %670 = vmatpush2.msra.mxu0 0.0
    %671 = vmatprep.subr.mxu0 0.0
    %672 = vmatpush2.msra.mxu0 0.0
    %673 = vmatprep.subr.mxu0 0.0
    %674 = vmatpush2.msra.mxu0 0.0
    %675 = vmatprep.subr.mxu0 0.0
    %676 = vmatpush2.msra.mxu0 0.0
    %677 = vmatprep.subr.mxu0 0.0
    %678 = vmatpush2.msra.mxu0 0.0
    %679 = vmatprep.subr.mxu0 0.0
    %680 = vmatpush2.msra.mxu0 0.0
    %681 = vmatprep.subr.mxu0 0.0
    %682 = vmatpush2.msra.mxu0 0.0
    %683 = vmatprep.subr.mxu0 0.0
    %684 = vmatpush2.msra.mxu0 0.0
    %685 = vmatprep.subr.mxu0 0.0
    %686 = vmatpush2.msra.mxu0 0.0
    %687 = vmatprep.subr.mxu0 0.0
    %688 = vmatpush2.msra.mxu0 0.0
    %689 = vmatprep.subr.mxu0 0.0
    %690 = vmatpush2.msra.mxu0 0.0
    %691 = vmatprep.subr.mxu0 0.0
    %692 = vmatpush2.msra.mxu0 0.0
    %693 = vmatprep.subr.mxu0 0.0
    %694 = vmatpush2.msra.mxu0 0.0
    %695 = vmatprep.subr.mxu0 0.0
    %696 = vmatpush2.msra.mxu0 0.0
    %697 = vmatprep.subr.mxu0 0.0
    %698 = vmatpush2.msra.mxu0 0.0
    %699 = vmatprep.mubr.f32.mxu0 0.0
    %700 = vmatmul.mubr.f32.gmra.mxu0 %v624
    %v701 = vpop.f32.mrf.mxu0
    %v702 = vadd.f32 %v622, %v701
    %v703 = vpop.f32.mrf.mxu0
    %704 = vmatprep.mubr.f32.mxu0 0.0
    %705 = vmatmul.mubr.f32.gmra.mxu0 %v627
    %v706 = vpop.f32.mrf.mxu0
    %v707 = vadd.f32 %v622, %v706
    %v708 = vpop.f32.mrf.mxu0
    %709 = vmatprep.mubr.f32.mxu0 0.0
    %710 = vmatmul.mubr.f32.gmra.mxu0 %v630
    %v711 = vpop.f32.mrf.mxu0
    %v712 = vadd.f32 %v622, %v711
    %v713 = vpop.f32.mrf.mxu0
    %714 = vmatprep.mubr.f32.mxu0 0.0
    %715 = vmatmul.mubr.f32.gmra.mxu0 %v633
    %v716 = vpop.f32.mrf.mxu0
    %v717 = vadd.f32 %v622, %v716
    %v718 = vpop.f32.mrf.mxu0
    %719 = vdwg.mxu0
    %v720 = vadd.f32 %v702, %v178
    %v721 = vadd.f32 %v707, %v183
    %v722 = vadd.f32 %v712, %v188
    %v723 = vadd.f32 %v717, %v193
    %v724 = vmax.f32 %v720, 0.0
    %v725 = vmax.f32 %v721, 0.0
    %v726 = vmax.f32 %v722, 0.0
    %v727 = vmax.f32 %v723, 0.0
    %v728 = vld [vmem:[#allocation2 + $0x1c0] sm:$0xff]
    %v729 = vld [vmem:[#allocation2 + $0x1c8] sm:$0xff]
    %v730 = vld [vmem:[#allocation2 + $0x1f2] sm:$0x1]
    %v731 = vlaneseq
    %v732 = vshrl.u32 %v731, 7
    %v733 = vsub.s32 0, %v732
    %v734 = vrot.slane %v730, %v733
    %v736 = vsel %vm98, %v724, 0
    %v739 = vsel %vm98, %v725, 0
    %v742 = vsel %vm98, %v726, 0
    %v745 = vsel %vm98, %v727, 0
    %747 = vmatprep.subr.mxu0 0.0
    %748 = vmatpush1.msra.mxu0 0.0
    %749 = vmatprep.subr.mxu0 0.0
    %750 = vmatpush1.msra.mxu0 0.0
    %751 = vmatprep.subr.mxu0 0.0
    %752 = vmatpush1.msra.mxu0 0.0
    %753 = vmatprep.subr.mxu0 0.0
    %754 = vmatpush1.msra.mxu0 0.0
    %755 = vmatprep.subr.mxu0 0.0
    %756 = vmatpush1.msra.mxu0 0.0
    %757 = vmatprep.subr.mxu0 0.0
    %758 = vmatpush1.msra.mxu0 0.0
    %759 = vmatprep.subr.mxu0 0.0
    %760 = vmatpush1.msra.mxu0 0.0
    %761 = vmatprep.subr.mxu0 0.0
    %762 = vmatpush1.msra.mxu0 0.0
    %763 = vmatprep.subr.mxu0 0.0
    %764 = vmatpush1.msra.mxu0 0.0
    %765 = vmatprep.subr.mxu0 0.0
    %766 = vmatpush1.msra.mxu0 0.0
    %767 = vmatprep.subr.mxu0 0.0
    %768 = vmatpush1.msra.mxu0 0.0
    %769 = vmatprep.subr.mxu0 0.0
    %770 = vmatpush1.msra.mxu0 0.0
    %771 = vmatprep.subr.mxu0 0.0
    %772 = vmatpush1.msra.mxu0 0.0
    %773 = vmatprep.subr.mxu0 0.0
    %774 = vmatpush1.msra.mxu0 0.0
    %775 = vmatprep.subr.mxu0 0.0
    %776 = vmatpush1.msra.mxu0 %v729
    %777 = vmatprep.subr.mxu0 0.0
    %778 = vmatpush1.msra.mxu0 %v728
    %779 = vmatprep.subr.mxu0 0.0
    %780 = vmatpush2.msra.mxu0 0.0
    %781 = vmatprep.subr.mxu0 0.0
    %782 = vmatpush2.msra.mxu0 0.0
    %783 = vmatprep.subr.mxu0 0.0
    %784 = vmatpush2.msra.mxu0 0.0
    %785 = vmatprep.subr.mxu0 0.0
    %786 = vmatpush2.msra.mxu0 0.0
    %787 = vmatprep.subr.mxu0 0.0
    %788 = vmatpush2.msra.mxu0 0.0
    %789 = vmatprep.subr.mxu0 0.0
    %790 = vmatpush2.msra.mxu0 0.0
    %791 = vmatprep.subr.mxu0 0.0
    %792 = vmatpush2.msra.mxu0 0.0
    %793 = vmatprep.subr.mxu0 0.0
    %794 = vmatpush2.msra.mxu0 0.0
    %795 = vmatprep.subr.mxu0 0.0
    %796 = vmatpush2.msra.mxu0 0.0
    %797 = vmatprep.subr.mxu0 0.0
    %798 = vmatpush2.msra.mxu0 0.0
    %799 = vmatprep.subr.mxu0 0.0
    %800 = vmatpush2.msra.mxu0 0.0
    %801 = vmatprep.subr.mxu0 0.0
    %802 = vmatpush2.msra.mxu0 0.0
    %803 = vmatprep.subr.mxu0 0.0
    %804 = vmatpush2.msra.mxu0 0.0
    %805 = vmatprep.subr.mxu0 0.0
    %806 = vmatpush2.msra.mxu0 0.0
    %807 = vmatprep.subr.mxu0 0.0
    %808 = vmatpush2.msra.mxu0 0.0
    %809 = vmatprep.subr.mxu0 0.0
    %810 = vmatpush2.msra.mxu0 0.0
    %811 = vmatprep.mubr.f32.mxu0 0.0
    %812 = vmatmul.mubr.f32.gmra.mxu0 %v736
    %v813 = vpop.f32.mrf.mxu0
    %v814 = vadd.f32 %v734, %v813
    %v815 = vpop.f32.mrf.mxu0
    %816 = vmatprep.mubr.f32.mxu0 0.0
    %817 = vmatmul.mubr.f32.gmra.mxu0 %v739
    %v818 = vpop.f32.mrf.mxu0
    %v819 = vadd.f32 %v734, %v818
    %v820 = vpop.f32.mrf.mxu0
    %821 = vmatprep.mubr.f32.mxu0 0.0
    %822 = vmatmul.mubr.f32.gmra.mxu0 %v742
    %v823 = vpop.f32.mrf.mxu0
    %v824 = vadd.f32 %v734, %v823
    %v825 = vpop.f32.mrf.mxu0
    %826 = vmatprep.mubr.f32.mxu0 0.0
    %827 = vmatmul.mubr.f32.gmra.mxu0 %v745
    %v828 = vpop.f32.mrf.mxu0
    %v829 = vadd.f32 %v734, %v828
    %v830 = vpop.f32.mrf.mxu0
    %831 = vdwg.mxu0
    %v832 = vrot.slane %v724, 7
    %v833 = vrot.slane %v725, 7
    %v834 = vrot.slane %v726, 7
    %v835 = vrot.slane %v727, 7
    %v836 = vsel %vm200, %v834, %v835
    %v837 = vsel %vm200, %v833, %v834
    %v838 = vsel %vm200, %v832, %v833
    %v839 = vsel %vm200, %v835, %v832
    %v840 = vsel %vm83, %v839, 0.0
    %v841 = vsel %vm84, %v838, 0.0
    %v842 = vsel %vm85, %v837, 0.0
    %v843 = vsel %vm86, %v836, 0.0
    %v844 = vrot.slane %v724, 1
    %v845 = vrot.slane %v725, 1
    %v846 = vrot.slane %v726, 1
    %v847 = vrot.slane %v727, 1
    %v848 = vsel %vm213, %v846, %v847
    %v849 = vsel %vm213, %v845, %v846
    %v850 = vsel %vm213, %v844, %v845
    %v851 = vsel %vm213, %v847, %v844
    %v852 = vsel %vm87, %v850, 0.0
    %v853 = vsel %vm88, %v849, 0.0
    %v854 = vsel %vm89, %v848, 0.0
    %v855 = vsel %vm90, %v851, 0.0
    %856 = vrot.lane.b32.xlu0 %v724, 16
    %v857 = vpop.permute.xlu0 %856
    %858 = vrot.lane.b32.xlu0 %v725, 16
    %v859 = vpop.permute.xlu0 %858
    %860 = vrot.lane.b32.xlu0 %v726, 16
    %v861 = vpop.permute.xlu0 %860
    %862 = vrot.lane.b32.xlu0 %v727, 16
    %v863 = vpop.permute.xlu0 %862
    %872 = vrot.lane.b32.xlu0 %v852, 32
    %v873 = vpop.permute.xlu0 %872
    %874 = vrot.lane.b32.xlu0 %v853, 32
    %v875 = vpop.permute.xlu0 %874
    %876 = vrot.lane.b32.xlu0 %v854, 32
    %v877 = vpop.permute.xlu0 %876
    %878 = vrot.lane.b32.xlu0 %v855, 32
    %v879 = vpop.permute.xlu0 %878
    %v884 = vsel %vm98, %v840, %v857
    %v885 = vsel %vm98, %v841, %v859
    %v886 = vsel %vm98, %v842, %v861
    %v887 = vsel %vm98, %v843, %v863
    %v888 = vsel %vm254, %v884, %v873
    %v889 = vsel %vm254, %v885, %v875
    %v890 = vsel %vm254, %v886, %v877
    %v891 = vsel %vm254, %v887, %v879
    %v892 = vld [vmem:[#allocation2 + $0x90] sm:$0xff]
    %v893 = vld [vmem:[#allocation2 + $0x98] sm:$0xff]
    %v894 = vld [vmem:[#allocation2 + $0xa0] sm:$0xff]
    %v895 = vld [vmem:[#allocation2 + $0xa8] sm:$0xff]
    %v896 = vld [vmem:[#allocation2 + $0xb0] sm:$0xff]
    %v897 = vld [vmem:[#allocation2 + $0xb8] sm:$0xff]
    %v898 = vld [vmem:[#allocation2 + $0x1eb] sm:$0x1]
    %v899 = vlaneseq
    %v900 = vshrl.u32 %v899, 7
    %v901 = vsub.s32 0, %v900
    %v902 = vrot.slane %v898, %v901
    %v904 = vsel %vm270, %v888, 0
    %v907 = vsel %vm270, %v889, 0
    %v910 = vsel %vm270, %v890, 0
    %v913 = vsel %vm270, %v891, 0
    %915 = vmatprep.subr.mxu0 0.0
    %916 = vmatpush1.msra.mxu0 0.0
    %917 = vmatprep.subr.mxu0 0.0
    %918 = vmatpush1.msra.mxu0 0.0
    %919 = vmatprep.subr.mxu0 0.0
    %920 = vmatpush1.msra.mxu0 0.0
    %921 = vmatprep.subr.mxu0 0.0
    %922 = vmatpush1.msra.mxu0 0.0
    %923 = vmatprep.subr.mxu0 0.0
    %924 = vmatpush1.msra.mxu0 0.0
    %925 = vmatprep.subr.mxu0 0.0
    %926 = vmatpush1.msra.mxu0 0.0
    %927 = vmatprep.subr.mxu0 0.0
    %928 = vmatpush1.msra.mxu0 0.0
    %929 = vmatprep.subr.mxu0 0.0
    %930 = vmatpush1.msra.mxu0 0.0
    %931 = vmatprep.subr.mxu0 0.0
    %932 = vmatpush1.msra.mxu0 0.0
    %933 = vmatprep.subr.mxu0 0.0
    %934 = vmatpush1.msra.mxu0 0.0
    %935 = vmatprep.subr.mxu0 0.0
    %936 = vmatpush1.msra.mxu0 %v897
    %937 = vmatprep.subr.mxu0 0.0
    %938 = vmatpush1.msra.mxu0 %v896
    %939 = vmatprep.subr.mxu0 0.0
    %940 = vmatpush1.msra.mxu0 %v895
    %941 = vmatprep.subr.mxu0 0.0
    %942 = vmatpush1.msra.mxu0 %v894
    %943 = vmatprep.subr.mxu0 0.0
    %944 = vmatpush1.msra.mxu0 %v893
    %945 = vmatprep.subr.mxu0 0.0
    %946 = vmatpush1.msra.mxu0 %v892
    %947 = vmatprep.subr.mxu0 0.0
    %948 = vmatpush2.msra.mxu0 0.0
    %949 = vmatprep.subr.mxu0 0.0
    %950 = vmatpush2.msra.mxu0 0.0
    %951 = vmatprep.subr.mxu0 0.0
    %952 = vmatpush2.msra.mxu0 0.0
    %953 = vmatprep.subr.mxu0 0.0
    %954 = vmatpush2.msra.mxu0 0.0
    %955 = vmatprep.subr.mxu0 0.0
    %956 = vmatpush2.msra.mxu0 0.0
    %957 = vmatprep.subr.mxu0 0.0
    %958 = vmatpush2.msra.mxu0 0.0
    %959 = vmatprep.subr.mxu0 0.0
    %960 = vmatpush2.msra.mxu0 0.0
    %961 = vmatprep.subr.mxu0 0.0
    %962 = vmatpush2.msra.mxu0 0.0
    %963 = vmatprep.subr.mxu0 0.0
    %964 = vmatpush2.msra.mxu0 0.0
    %965 = vmatprep.subr.mxu0 0.0
    %966 = vmatpush2.msra.mxu0 0.0
    %967 = vmatprep.subr.mxu0 0.0
    %968 = vmatpush2.msra.mxu0 0.0
    %969 = vmatprep.subr.mxu0 0.0
    %970 = vmatpush2.msra.mxu0 0.0
    %971 = vmatprep.subr.mxu0 0.0
    %972 = vmatpush2.msra.mxu0 0.0
    %973 = vmatprep.subr.mxu0 0.0
    %974 = vmatpush2.msra.mxu0 0.0
    %975 = vmatprep.subr.mxu0 0.0
    %976 = vmatpush2.msra.mxu0 0.0
    %977 = vmatprep.subr.mxu0 0.0
    %978 = vmatpush2.msra.mxu0 0.0
    %979 = vmatprep.mubr.f32.mxu0 0.0
    %980 = vmatmul.mubr.f32.gmra.mxu0 %v904
    %v981 = vpop.f32.mrf.mxu0
    %v982 = vadd.f32 %v902, %v981
    %v983 = vpop.f32.mrf.mxu0
    %984 = vmatprep.mubr.f32.mxu0 0.0
    %985 = vmatmul.mubr.f32.gmra.mxu0 %v907
    %v986 = vpop.f32.mrf.mxu0
    %v987 = vadd.f32 %v902, %v986
    %v988 = vpop.f32.mrf.mxu0
    %989 = vmatprep.mubr.f32.mxu0 0.0
    %990 = vmatmul.mubr.f32.gmra.mxu0 %v910
    %v991 = vpop.f32.mrf.mxu0
    %v992 = vadd.f32 %v902, %v991
    %v993 = vpop.f32.mrf.mxu0
    %994 = vmatprep.mubr.f32.mxu0 0.0
    %995 = vmatmul.mubr.f32.gmra.mxu0 %v913
    %v996 = vpop.f32.mrf.mxu0
    %v997 = vadd.f32 %v902, %v996
    %v998 = vpop.f32.mrf.mxu0
    %999 = vdwg.mxu0
    %v1000 = vmax.f32 %v982, 0.0
    %v1001 = vmax.f32 %v987, 0.0
    %v1002 = vmax.f32 %v992, 0.0
    %v1003 = vmax.f32 %v997, 0.0
    %v1004 = vrot.slane %v1000, 7
    %v1005 = vrot.slane %v1001, 7
    %v1006 = vrot.slane %v1002, 7
    %v1007 = vrot.slane %v1003, 7
    %v1008 = vsel %vm200, %v1006, %v1007
    %v1009 = vsel %vm200, %v1005, %v1006
    %v1010 = vsel %vm200, %v1004, %v1005
    %v1011 = vsel %vm200, %v1007, %v1004
    %v1012 = vsel %vm83, %v1011, 0.0
    %v1013 = vsel %vm84, %v1010, 0.0
    %v1014 = vsel %vm85, %v1009, 0.0
    %v1015 = vsel %vm86, %v1008, 0.0
    %v1016 = vrot.slane %v1000, 1
    %v1017 = vrot.slane %v1001, 1
    %v1018 = vrot.slane %v1002, 1
    %v1019 = vrot.slane %v1003, 1
    %v1020 = vsel %vm213, %v1018, %v1019
    %v1021 = vsel %vm213, %v1017, %v1018
    %v1022 = vsel %vm213, %v1016, %v1017
    %v1023 = vsel %vm213, %v1019, %v1016
    %v1024 = vsel %vm87, %v1022, 0.0
    %v1025 = vsel %vm88, %v1021, 0.0
    %v1026 = vsel %vm89, %v1020, 0.0
    %v1027 = vsel %vm90, %v1023, 0.0
    %1032 = vrot.lane.b32.xlu0 %v1000, 16
    %v1033 = vpop.permute.xlu0 %1032
    %1034 = vrot.lane.b32.xlu0 %v1001, 16
    %v1035 = vpop.permute.xlu0 %1034
    %1036 = vrot.lane.b32.xlu0 %v1002, 16
    %v1037 = vpop.permute.xlu0 %1036
    %1038 = vrot.lane.b32.xlu0 %v1003, 16
    %v1039 = vpop.permute.xlu0 %1038
    %1048 = vrot.lane.b32.xlu0 %v1024, 32
    %v1049 = vpop.permute.xlu0 %1048
    %1050 = vrot.lane.b32.xlu0 %v1025, 32
    %v1051 = vpop.permute.xlu0 %1050
    %1052 = vrot.lane.b32.xlu0 %v1026, 32
    %v1053 = vpop.permute.xlu0 %1052
    %1054 = vrot.lane.b32.xlu0 %v1027, 32
    %v1055 = vpop.permute.xlu0 %1054
    %v1060 = vsel %vm98, %v1012, %v1033
    %v1061 = vsel %vm98, %v1013, %v1035
    %v1062 = vsel %vm98, %v1014, %v1037
    %v1063 = vsel %vm98, %v1015, %v1039
    %v1064 = vsel %vm254, %v1060, %v1049
    %v1065 = vsel %vm254, %v1061, %v1051
    %v1066 = vsel %vm254, %v1062, %v1053
    %v1067 = vsel %vm254, %v1063, %v1055
    %v1068 = vld [vmem:[#allocation2 + $0xc0] sm:$0xff]
    %v1069 = vld [vmem:[#allocation2 + $0xc8] sm:$0xff]
    %v1070 = vld [vmem:[#allocation2 + $0xd0] sm:$0xff]
    %v1071 = vld [vmem:[#allocation2 + $0xd8] sm:$0xff]
    %v1072 = vld [vmem:[#allocation2 + $0xe0] sm:$0xff]
    %v1073 = vld [vmem:[#allocation2 + $0xe8] sm:$0xff]
    %v1074 = vld [vmem:[#allocation2 + $0x1ec] sm:$0x1]
    %v1075 = vlaneseq
    %v1076 = vshrl.u32 %v1075, 7
    %v1077 = vsub.s32 0, %v1076
    %v1078 = vrot.slane %v1074, %v1077
    %v1080 = vsel %vm270, %v1064, 0
    %v1083 = vsel %vm270, %v1065, 0
    %v1086 = vsel %vm270, %v1066, 0
    %v1089 = vsel %vm270, %v1067, 0
    %1091 = vmatprep.subr.mxu0 0.0
    %1092 = vmatpush1.msra.mxu0 0.0
    %1093 = vmatprep.subr.mxu0 0.0
    %1094 = vmatpush1.msra.mxu0 0.0
    %1095 = vmatprep.subr.mxu0 0.0
    %1096 = vmatpush1.msra.mxu0 0.0
    %1097 = vmatprep.subr.mxu0 0.0
    %1098 = vmatpush1.msra.mxu0 0.0
    %1099 = vmatprep.subr.mxu0 0.0
    %1100 = vmatpush1.msra.mxu0 0.0
    %1101 = vmatprep.subr.mxu0 0.0
    %1102 = vmatpush1.msra.mxu0 0.0
    %1103 = vmatprep.subr.mxu0 0.0
    %1104 = vmatpush1.msra.mxu0 0.0
    %1105 = vmatprep.subr.mxu0 0.0
    %1106 = vmatpush1.msra.mxu0 0.0
    %1107 = vmatprep.subr.mxu0 0.0
    %1108 = vmatpush1.msra.mxu0 0.0
    %1109 = vmatprep.subr.mxu0 0.0
    %1110 = vmatpush1.msra.mxu0 0.0
    %1111 = vmatprep.subr.mxu0 0.0
    %1112 = vmatpush1.msra.mxu0 %v1073
    %1113 = vmatprep.subr.mxu0 0.0
    %1114 = vmatpush1.msra.mxu0 %v1072
    %1115 = vmatprep.subr.mxu0 0.0
    %1116 = vmatpush1.msra.mxu0 %v1071
    %1117 = vmatprep.subr.mxu0 0.0
    %1118 = vmatpush1.msra.mxu0 %v1070
    %1119 = vmatprep.subr.mxu0 0.0
    %1120 = vmatpush1.msra.mxu0 %v1069
    %1121 = vmatprep.subr.mxu0 0.0
    %1122 = vmatpush1.msra.mxu0 %v1068
    %1123 = vmatprep.subr.mxu0 0.0
    %1124 = vmatpush2.msra.mxu0 0.0
    %1125 = vmatprep.subr.mxu0 0.0
    %1126 = vmatpush2.msra.mxu0 0.0
    %1127 = vmatprep.subr.mxu0 0.0
    %1128 = vmatpush2.msra.mxu0 0.0
    %1129 = vmatprep.subr.mxu0 0.0
    %1130 = vmatpush2.msra.mxu0 0.0
    %1131 = vmatprep.subr.mxu0 0.0
    %1132 = vmatpush2.msra.mxu0 0.0
    %1133 = vmatprep.subr.mxu0 0.0
    %1134 = vmatpush2.msra.mxu0 0.0
    %1135 = vmatprep.subr.mxu0 0.0
    %1136 = vmatpush2.msra.mxu0 0.0
    %1137 = vmatprep.subr.mxu0 0.0
    %1138 = vmatpush2.msra.mxu0 0.0
    %1139 = vmatprep.subr.mxu0 0.0
    %1140 = vmatpush2.msra.mxu0 0.0
    %1141 = vmatprep.subr.mxu0 0.0
    %1142 = vmatpush2.msra.mxu0 0.0
    %1143 = vmatprep.subr.mxu0 0.0
    %1144 = vmatpush2.msra.mxu0 0.0
    %1145 = vmatprep.subr.mxu0 0.0
    %1146 = vmatpush2.msra.mxu0 0.0
    %1147 = vmatprep.subr.mxu0 0.0
    %1148 = vmatpush2.msra.mxu0 0.0
    %1149 = vmatprep.subr.mxu0 0.0
    %1150 = vmatpush2.msra.mxu0 0.0
    %1151 = vmatprep.subr.mxu0 0.0
    %1152 = vmatpush2.msra.mxu0 0.0
    %1153 = vmatprep.subr.mxu0 0.0
    %1154 = vmatpush2.msra.mxu0 0.0
    %1155 = vmatprep.mubr.f32.mxu0 0.0
    %1156 = vmatmul.mubr.f32.gmra.mxu0 %v1080
    %v1157 = vpop.f32.mrf.mxu0
    %v1158 = vadd.f32 %v1078, %v1157
    %v1159 = vpop.f32.mrf.mxu0
    %1160 = vmatprep.mubr.f32.mxu0 0.0
    %1161 = vmatmul.mubr.f32.gmra.mxu0 %v1083
    %v1162 = vpop.f32.mrf.mxu0
    %v1163 = vadd.f32 %v1078, %v1162
    %v1164 = vpop.f32.mrf.mxu0
    %1165 = vmatprep.mubr.f32.mxu0 0.0
    %1166 = vmatmul.mubr.f32.gmra.mxu0 %v1086
    %v1167 = vpop.f32.mrf.mxu0
    %v1168 = vadd.f32 %v1078, %v1167
    %v1169 = vpop.f32.mrf.mxu0
    %1170 = vmatprep.mubr.f32.mxu0 0.0
    %1171 = vmatmul.mubr.f32.gmra.mxu0 %v1089
    %v1172 = vpop.f32.mrf.mxu0
    %v1173 = vadd.f32 %v1078, %v1172
    %v1174 = vpop.f32.mrf.mxu0
    %1175 = vdwg.mxu0
    %v1176 = vmax.f32 %v1158, 0.0
    %v1177 = vmax.f32 %v1163, 0.0
    %v1178 = vmax.f32 %v1168, 0.0
    %v1179 = vmax.f32 %v1173, 0.0
    %v1180 = vrot.slane %v1176, 7
    %v1181 = vrot.slane %v1177, 7
    %v1182 = vrot.slane %v1178, 7
    %v1183 = vrot.slane %v1179, 7
    %v1184 = vsel %vm200, %v1182, %v1183
    %v1185 = vsel %vm200, %v1181, %v1182
    %v1186 = vsel %vm200, %v1180, %v1181
    %v1187 = vsel %vm200, %v1183, %v1180
    %v1188 = vsel %vm83, %v1187, 0.0
    %v1189 = vsel %vm84, %v1186, 0.0
    %v1190 = vsel %vm85, %v1185, 0.0
    %v1191 = vsel %vm86, %v1184, 0.0
    %v1192 = vrot.slane %v1176, 1
    %v1193 = vrot.slane %v1177, 1
    %v1194 = vrot.slane %v1178, 1
    %v1195 = vrot.slane %v1179, 1
    %v1196 = vsel %vm213, %v1194, %v1195
    %v1197 = vsel %vm213, %v1193, %v1194
    %v1198 = vsel %vm213, %v1192, %v1193
    %v1199 = vsel %vm213, %v1195, %v1192
    %v1200 = vsel %vm87, %v1198, 0.0
    %v1201 = vsel %vm88, %v1197, 0.0
    %v1202 = vsel %vm89, %v1196, 0.0
    %v1203 = vsel %vm90, %v1199, 0.0
    %1208 = vrot.lane.b32.xlu0 %v1176, 16
    %v1209 = vpop.permute.xlu0 %1208
    %1210 = vrot.lane.b32.xlu0 %v1177, 16
    %v1211 = vpop.permute.xlu0 %1210
    %1212 = vrot.lane.b32.xlu0 %v1178, 16
    %v1213 = vpop.permute.xlu0 %1212
    %1214 = vrot.lane.b32.xlu0 %v1179, 16
    %v1215 = vpop.permute.xlu0 %1214
    %1224 = vrot.lane.b32.xlu0 %v1200, 32
    %v1225 = vpop.permute.xlu0 %1224
    %1226 = vrot.lane.b32.xlu0 %v1201, 32
    %v1227 = vpop.permute.xlu0 %1226
    %1228 = vrot.lane.b32.xlu0 %v1202, 32
    %v1229 = vpop.permute.xlu0 %1228
    %1230 = vrot.lane.b32.xlu0 %v1203, 32
    %v1231 = vpop.permute.xlu0 %1230
    %v1236 = vsel %vm98, %v1188, %v1209
    %v1237 = vsel %vm98, %v1189, %v1211
    %v1238 = vsel %vm98, %v1190, %v1213
    %v1239 = vsel %vm98, %v1191, %v1215
    %v1240 = vsel %vm254, %v1236, %v1225
    %v1241 = vsel %vm254, %v1237, %v1227
    %v1242 = vsel %vm254, %v1238, %v1229
    %v1243 = vsel %vm254, %v1239, %v1231
    %v1244 = vld [vmem:[#allocation2 + $0xf0] sm:$0xff]
    %v1245 = vld [vmem:[#allocation2 + $0xf8] sm:$0xff]
    %v1246 = vld [vmem:[#allocation2 + $0x100] sm:$0xff]
    %v1247 = vld [vmem:[#allocation2 + $0x108] sm:$0xff]
    %v1248 = vld [vmem:[#allocation2 + $0x110] sm:$0xff]
    %v1249 = vld [vmem:[#allocation2 + $0x118] sm:$0xff]
    %v1250 = vld [vmem:[#allocation2 + $0x1ed] sm:$0x1]
    %v1251 = vlaneseq
    %v1252 = vshrl.u32 %v1251, 7
    %v1253 = vsub.s32 0, %v1252
    %v1254 = vrot.slane %v1250, %v1253
    %v1256 = vsel %vm270, %v1240, 0
    %v1259 = vsel %vm270, %v1241, 0
    %v1262 = vsel %vm270, %v1242, 0
    %v1265 = vsel %vm270, %v1243, 0
    %1267 = vmatprep.subr.mxu0 0.0
    %1268 = vmatpush1.msra.mxu0 0.0
    %1269 = vmatprep.subr.mxu0 0.0
    %1270 = vmatpush1.msra.mxu0 0.0
    %1271 = vmatprep.subr.mxu0 0.0
    %1272 = vmatpush1.msra.mxu0 0.0
    %1273 = vmatprep.subr.mxu0 0.0
    %1274 = vmatpush1.msra.mxu0 0.0
    %1275 = vmatprep.subr.mxu0 0.0
    %1276 = vmatpush1.msra.mxu0 0.0
    %1277 = vmatprep.subr.mxu0 0.0
    %1278 = vmatpush1.msra.mxu0 0.0
    %1279 = vmatprep.subr.mxu0 0.0
    %1280 = vmatpush1.msra.mxu0 0.0
    %1281 = vmatprep.subr.mxu0 0.0
    %1282 = vmatpush1.msra.mxu0 0.0
    %1283 = vmatprep.subr.mxu0 0.0
    %1284 = vmatpush1.msra.mxu0 0.0
    %1285 = vmatprep.subr.mxu0 0.0
    %1286 = vmatpush1.msra.mxu0 0.0
    %1287 = vmatprep.subr.mxu0 0.0
    %1288 = vmatpush1.msra.mxu0 %v1249
    %1289 = vmatprep.subr.mxu0 0.0
    %1290 = vmatpush1.msra.mxu0 %v1248
    %1291 = vmatprep.subr.mxu0 0.0
    %1292 = vmatpush1.msra.mxu0 %v1247
    %1293 = vmatprep.subr.mxu0 0.0
    %1294 = vmatpush1.msra.mxu0 %v1246
    %1295 = vmatprep.subr.mxu0 0.0
    %1296 = vmatpush1.msra.mxu0 %v1245
    %1297 = vmatprep.subr.mxu0 0.0
    %1298 = vmatpush1.msra.mxu0 %v1244
    %1299 = vmatprep.subr.mxu0 0.0
    %1300 = vmatpush2.msra.mxu0 0.0
    %1301 = vmatprep.subr.mxu0 0.0
    %1302 = vmatpush2.msra.mxu0 0.0
    %1303 = vmatprep.subr.mxu0 0.0
    %1304 = vmatpush2.msra.mxu0 0.0
    %1305 = vmatprep.subr.mxu0 0.0
    %1306 = vmatpush2.msra.mxu0 0.0
    %1307 = vmatprep.subr.mxu0 0.0
    %1308 = vmatpush2.msra.mxu0 0.0
    %1309 = vmatprep.subr.mxu0 0.0
    %1310 = vmatpush2.msra.mxu0 0.0
    %1311 = vmatprep.subr.mxu0 0.0
    %1312 = vmatpush2.msra.mxu0 0.0
    %1313 = vmatprep.subr.mxu0 0.0
    %1314 = vmatpush2.msra.mxu0 0.0
    %1315 = vmatprep.subr.mxu0 0.0
    %1316 = vmatpush2.msra.mxu0 0.0
    %1317 = vmatprep.subr.mxu0 0.0
    %1318 = vmatpush2.msra.mxu0 0.0
    %1319 = vmatprep.subr.mxu0 0.0
    %1320 = vmatpush2.msra.mxu0 0.0
    %1321 = vmatprep.subr.mxu0 0.0
    %1322 = vmatpush2.msra.mxu0 0.0
    %1323 = vmatprep.subr.mxu0 0.0
    %1324 = vmatpush2.msra.mxu0 0.0
    %1325 = vmatprep.subr.mxu0 0.0
    %1326 = vmatpush2.msra.mxu0 0.0
    %1327 = vmatprep.subr.mxu0 0.0
    %1328 = vmatpush2.msra.mxu0 0.0
    %1329 = vmatprep.subr.mxu0 0.0
    %1330 = vmatpush2.msra.mxu0 0.0
    %1331 = vmatprep.mubr.f32.mxu0 0.0
    %1332 = vmatmul.mubr.f32.gmra.mxu0 %v1256
    %v1333 = vpop.f32.mrf.mxu0
    %v1334 = vadd.f32 %v1254, %v1333
    %v1335 = vpop.f32.mrf.mxu0
    %1336 = vmatprep.mubr.f32.mxu0 0.0
    %1337 = vmatmul.mubr.f32.gmra.mxu0 %v1259
    %v1338 = vpop.f32.mrf.mxu0
    %v1339 = vadd.f32 %v1254, %v1338
    %v1340 = vpop.f32.mrf.mxu0
    %1341 = vmatprep.mubr.f32.mxu0 0.0
    %1342 = vmatmul.mubr.f32.gmra.mxu0 %v1262
    %v1343 = vpop.f32.mrf.mxu0
    %v1344 = vadd.f32 %v1254, %v1343
    %v1345 = vpop.f32.mrf.mxu0
    %1346 = vmatprep.mubr.f32.mxu0 0.0
    %1347 = vmatmul.mubr.f32.gmra.mxu0 %v1265
    %v1348 = vpop.f32.mrf.mxu0
    %v1349 = vadd.f32 %v1254, %v1348
    %v1350 = vpop.f32.mrf.mxu0
    %1351 = vdwg.mxu0
    %v1352 = vadd.f32 %v1334, %v814
    %v1353 = vadd.f32 %v1339, %v819
    %v1354 = vadd.f32 %v1344, %v824
    %v1355 = vadd.f32 %v1349, %v829
    %v1356 = vmax.f32 %v1352, 0.0
    %v1357 = vmax.f32 %v1353, 0.0
    %v1358 = vmax.f32 %v1354, 0.0
    %v1359 = vmax.f32 %v1355, 0.0
    %v1360 = vrot.slane %v1356, 7
    %v1361 = vrot.slane %v1357, 7
    %v1362 = vrot.slane %v1358, 7
    %v1363 = vrot.slane %v1359, 7
    %v1364 = vsel %vm200, %v1362, %v1363
    %v1365 = vsel %vm200, %v1361, %v1362
    %v1366 = vsel %vm200, %v1360, %v1361
    %v1367 = vsel %vm200, %v1363, %v1360
    %v1368 = vsel %vm83, %v1367, 0.0
    %v1369 = vsel %vm84, %v1366, 0.0
    %v1370 = vsel %vm85, %v1365, 0.0
    %v1371 = vsel %vm86, %v1364, 0.0
    %v1372 = vrot.slane %v1356, 1
    %v1373 = vrot.slane %v1357, 1
    %v1374 = vrot.slane %v1358, 1
    %v1375 = vrot.slane %v1359, 1
    %v1376 = vsel %vm213, %v1374, %v1375
    %v1377 = vsel %vm213, %v1373, %v1374
    %v1378 = vsel %vm213, %v1372, %v1373
    %v1379 = vsel %vm213, %v1375, %v1372
    %v1380 = vsel %vm87, %v1378, 0.0
    %v1381 = vsel %vm88, %v1377, 0.0
    %v1382 = vsel %vm89, %v1376, 0.0
    %v1383 = vsel %vm90, %v1379, 0.0
    %1388 = vrot.lane.b32.xlu0 %v1356, 16
    %v1389 = vpop.permute.xlu0 %1388
    %1390 = vrot.lane.b32.xlu0 %v1357, 16
    %v1391 = vpop.permute.xlu0 %1390
    %1392 = vrot.lane.b32.xlu0 %v1358, 16
    %v1393 = vpop.permute.xlu0 %1392
    %1394 = vrot.lane.b32.xlu0 %v1359, 16
    %v1395 = vpop.permute.xlu0 %1394
    %1404 = vrot.lane.b32.xlu0 %v1380, 32
    %v1405 = vpop.permute.xlu0 %1404
    %1406 = vrot.lane.b32.xlu0 %v1381, 32
    %v1407 = vpop.permute.xlu0 %1406
    %1408 = vrot.lane.b32.xlu0 %v1382, 32
    %v1409 = vpop.permute.xlu0 %1408
    %1410 = vrot.lane.b32.xlu0 %v1383, 32
    %v1411 = vpop.permute.xlu0 %1410
    %v1416 = vsel %vm98, %v1368, %v1389
    %v1417 = vsel %vm98, %v1369, %v1391
    %v1418 = vsel %vm98, %v1370, %v1393
    %v1419 = vsel %vm98, %v1371, %v1395
    %v1420 = vsel %vm254, %v1416, %v1405
    %v1421 = vsel %vm254, %v1417, %v1407
    %v1422 = vsel %vm254, %v1418, %v1409
    %v1423 = vsel %vm254, %v1419, %v1411
    %v1424 = vld [vmem:[#allocation2 + $0x120] sm:$0xff]
    %v1425 = vld [vmem:[#allocation2 + $0x128] sm:$0xff]
    %v1426 = vld [vmem:[#allocation2 + $0x130] sm:$0xff]
    %v1427 = vld [vmem:[#allocation2 + $0x138] sm:$0xff]
    %v1428 = vld [vmem:[#allocation2 + $0x140] sm:$0xff]
    %v1429 = vld [vmem:[#allocation2 + $0x148] sm:$0xff]
    %v1430 = vld [vmem:[#allocation2 + $0x1ee] sm:$0x1]
    %v1431 = vlaneseq
    %v1432 = vshrl.u32 %v1431, 7
    %v1433 = vsub.s32 0, %v1432
    %v1434 = vrot.slane %v1430, %v1433
    %v1436 = vsel %vm270, %v1420, 0
    %v1439 = vsel %vm270, %v1421, 0
    %v1442 = vsel %vm270, %v1422, 0
    %v1445 = vsel %vm270, %v1423, 0
    %1447 = vmatprep.subr.mxu0 0.0
    %1448 = vmatpush1.msra.mxu0 0.0
    %1449 = vmatprep.subr.mxu0 0.0
    %1450 = vmatpush1.msra.mxu0 0.0
    %1451 = vmatprep.subr.mxu0 0.0
    %1452 = vmatpush1.msra.mxu0 0.0
    %1453 = vmatprep.subr.mxu0 0.0
    %1454 = vmatpush1.msra.mxu0 0.0
    %1455 = vmatprep.subr.mxu0 0.0
    %1456 = vmatpush1.msra.mxu0 0.0
    %1457 = vmatprep.subr.mxu0 0.0
    %1458 = vmatpush1.msra.mxu0 0.0
    %1459 = vmatprep.subr.mxu0 0.0
    %1460 = vmatpush1.msra.mxu0 0.0
    %1461 = vmatprep.subr.mxu0 0.0
    %1462 = vmatpush1.msra.mxu0 0.0
    %1463 = vmatprep.subr.mxu0 0.0
    %1464 = vmatpush1.msra.mxu0 0.0
    %1465 = vmatprep.subr.mxu0 0.0
    %1466 = vmatpush1.msra.mxu0 0.0
    %1467 = vmatprep.subr.mxu0 0.0
    %1468 = vmatpush1.msra.mxu0 %v1429
    %1469 = vmatprep.subr.mxu0 0.0
    %1470 = vmatpush1.msra.mxu0 %v1428
    %1471 = vmatprep.subr.mxu0 0.0
    %1472 = vmatpush1.msra.mxu0 %v1427
    %1473 = vmatprep.subr.mxu0 0.0
    %1474 = vmatpush1.msra.mxu0 %v1426
    %1475 = vmatprep.subr.mxu0 0.0
    %1476 = vmatpush1.msra.mxu0 %v1425
    %1477 = vmatprep.subr.mxu0 0.0
    %1478 = vmatpush1.msra.mxu0 %v1424
    %1479 = vmatprep.subr.mxu0 0.0
    %1480 = vmatpush2.msra.mxu0 0.0
    %1481 = vmatprep.subr.mxu0 0.0
    %1482 = vmatpush2.msra.mxu0 0.0
    %1483 = vmatprep.subr.mxu0 0.0
    %1484 = vmatpush2.msra.mxu0 0.0
    %1485 = vmatprep.subr.mxu0 0.0
    %1486 = vmatpush2.msra.mxu0 0.0
    %1487 = vmatprep.subr.mxu0 0.0
    %1488 = vmatpush2.msra.mxu0 0.0
    %1489 = vmatprep.subr.mxu0 0.0
    %1490 = vmatpush2.msra.mxu0 0.0
    %1491 = vmatprep.subr.mxu0 0.0
    %1492 = vmatpush2.msra.mxu0 0.0
    %1493 = vmatprep.subr.mxu0 0.0
    %1494 = vmatpush2.msra.mxu0 0.0
    %1495 = vmatprep.subr.mxu0 0.0
    %1496 = vmatpush2.msra.mxu0 0.0
    %1497 = vmatprep.subr.mxu0 0.0
    %1498 = vmatpush2.msra.mxu0 0.0
    %1499 = vmatprep.subr.mxu0 0.0
    %1500 = vmatpush2.msra.mxu0 0.0
    %1501 = vmatprep.subr.mxu0 0.0
    %1502 = vmatpush2.msra.mxu0 0.0
    %1503 = vmatprep.subr.mxu0 0.0
    %1504 = vmatpush2.msra.mxu0 0.0
    %1505 = vmatprep.subr.mxu0 0.0
    %1506 = vmatpush2.msra.mxu0 0.0
    %1507 = vmatprep.subr.mxu0 0.0
    %1508 = vmatpush2.msra.mxu0 0.0
    %1509 = vmatprep.subr.mxu0 0.0
    %1510 = vmatpush2.msra.mxu0 0.0
    %1511 = vmatprep.mubr.f32.mxu0 0.0
    %1512 = vmatmul.mubr.f32.gmra.mxu0 %v1436
    %v1513 = vpop.f32.mrf.mxu0
    %v1514 = vadd.f32 %v1434, %v1513
    %v1515 = vpop.f32.mrf.mxu0
    %1516 = vmatprep.mubr.f32.mxu0 0.0
    %1517 = vmatmul.mubr.f32.gmra.mxu0 %v1439
    %v1518 = vpop.f32.mrf.mxu0
    %v1519 = vadd.f32 %v1434, %v1518
    %v1520 = vpop.f32.mrf.mxu0
    %1521 = vmatprep.mubr.f32.mxu0 0.0
    %1522 = vmatmul.mubr.f32.gmra.mxu0 %v1442
    %v1523 = vpop.f32.mrf.mxu0
    %v1524 = vadd.f32 %v1434, %v1523
    %v1525 = vpop.f32.mrf.mxu0
    %1526 = vmatprep.mubr.f32.mxu0 0.0
    %1527 = vmatmul.mubr.f32.gmra.mxu0 %v1445
    %v1528 = vpop.f32.mrf.mxu0
    %v1529 = vadd.f32 %v1434, %v1528
    %v1530 = vpop.f32.mrf.mxu0
    %1531 = vdwg.mxu0
    %v1532 = vmax.f32 %v1514, 0.0
    %v1533 = vmax.f32 %v1519, 0.0
    %v1534 = vmax.f32 %v1524, 0.0
    %v1535 = vmax.f32 %v1529, 0.0
    %v1536 = vrot.slane %v1532, 7
    %v1537 = vrot.slane %v1533, 7
    %v1538 = vrot.slane %v1534, 7
    %v1539 = vrot.slane %v1535, 7
    %v1540 = vsel %vm200, %v1538, %v1539
    %v1541 = vsel %vm200, %v1537, %v1538
    %v1542 = vsel %vm200, %v1536, %v1537
    %v1543 = vsel %vm200, %v1539, %v1536
    %v1544 = vsel %vm83, %v1543, 0.0
    %v1545 = vsel %vm84, %v1542, 0.0
    %v1546 = vsel %vm85, %v1541, 0.0
    %v1547 = vsel %vm86, %v1540, 0.0
    %v1548 = vrot.slane %v1532, 1
    %v1549 = vrot.slane %v1533, 1
    %v1550 = vrot.slane %v1534, 1
    %v1551 = vrot.slane %v1535, 1
    %v1552 = vsel %vm213, %v1550, %v1551
    %v1553 = vsel %vm213, %v1549, %v1550
    %v1554 = vsel %vm213, %v1548, %v1549
    %v1555 = vsel %vm213, %v1551, %v1548
    %v1556 = vsel %vm87, %v1554, 0.0
    %v1557 = vsel %vm88, %v1553, 0.0
    %v1558 = vsel %vm89, %v1552, 0.0
    %v1559 = vsel %vm90, %v1555, 0.0
    %1564 = vrot.lane.b32.xlu0 %v1532, 16
    %v1565 = vpop.permute.xlu0 %1564
    %1566 = vrot.lane.b32.xlu0 %v1533, 16
    %v1567 = vpop.permute.xlu0 %1566
    %1568 = vrot.lane.b32.xlu0 %v1534, 16
    %v1569 = vpop.permute.xlu0 %1568
    %1570 = vrot.lane.b32.xlu0 %v1535, 16
    %v1571 = vpop.permute.xlu0 %1570
    %1580 = vrot.lane.b32.xlu0 %v1556, 32
    %v1581 = vpop.permute.xlu0 %1580
    %1582 = vrot.lane.b32.xlu0 %v1557, 32
    %v1583 = vpop.permute.xlu0 %1582
    %1584 = vrot.lane.b32.xlu0 %v1558, 32
    %v1585 = vpop.permute.xlu0 %1584
    %1586 = vrot.lane.b32.xlu0 %v1559, 32
    %v1587 = vpop.permute.xlu0 %1586
    %v1592 = vsel %vm98, %v1544, %v1565
    %v1593 = vsel %vm98, %v1545, %v1567
    %v1594 = vsel %vm98, %v1546, %v1569
    %v1595 = vsel %vm98, %v1547, %v1571
    %v1596 = vsel %vm254, %v1592, %v1581
    %v1597 = vsel %vm254, %v1593, %v1583
    %v1598 = vsel %vm254, %v1594, %v1585
    %v1599 = vsel %vm254, %v1595, %v1587
    %v1600 = vld [vmem:[#allocation2 + $0x150] sm:$0xff]
    %v1601 = vld [vmem:[#allocation2 + $0x158] sm:$0xff]
    %v1602 = vld [vmem:[#allocation2 + $0x160] sm:$0xff]
    %v1603 = vld [vmem:[#allocation2 + $0x168] sm:$0xff]
    %v1604 = vld [vmem:[#allocation2 + $0x170] sm:$0xff]
    %v1605 = vld [vmem:[#allocation2 + $0x178] sm:$0xff]
    %v1606 = vld [vmem:[#allocation2 + $0x1ef] sm:$0x1]
    %v1607 = vlaneseq
    %v1608 = vshrl.u32 %v1607, 7
    %v1609 = vsub.s32 0, %v1608
    %v1610 = vrot.slane %v1606, %v1609
    %v1612 = vsel %vm270, %v1596, 0
    %v1615 = vsel %vm270, %v1597, 0
    %v1618 = vsel %vm270, %v1598, 0
    %v1621 = vsel %vm270, %v1599, 0
    %1623 = vmatprep.subr.mxu0 0.0
    %1624 = vmatpush1.msra.mxu0 0.0
    %1625 = vmatprep.subr.mxu0 0.0
    %1626 = vmatpush1.msra.mxu0 0.0
    %1627 = vmatprep.subr.mxu0 0.0
    %1628 = vmatpush1.msra.mxu0 0.0
    %1629 = vmatprep.subr.mxu0 0.0
    %1630 = vmatpush1.msra.mxu0 0.0
    %1631 = vmatprep.subr.mxu0 0.0
    %1632 = vmatpush1.msra.mxu0 0.0
    %1633 = vmatprep.subr.mxu0 0.0
    %1634 = vmatpush1.msra.mxu0 0.0
    %1635 = vmatprep.subr.mxu0 0.0
    %1636 = vmatpush1.msra.mxu0 0.0
    %1637 = vmatprep.subr.mxu0 0.0
    %1638 = vmatpush1.msra.mxu0 0.0
    %1639 = vmatprep.subr.mxu0 0.0
    %1640 = vmatpush1.msra.mxu0 0.0
    %1641 = vmatprep.subr.mxu0 0.0
    %1642 = vmatpush1.msra.mxu0 0.0
    %1643 = vmatprep.subr.mxu0 0.0
    %1644 = vmatpush1.msra.mxu0 %v1605
    %1645 = vmatprep.subr.mxu0 0.0
    %1646 = vmatpush1.msra.mxu0 %v1604
    %1647 = vmatprep.subr.mxu0 0.0
    %1648 = vmatpush1.msra.mxu0 %v1603
    %1649 = vmatprep.subr.mxu0 0.0
    %1650 = vmatpush1.msra.mxu0 %v1602
    %1651 = vmatprep.subr.mxu0 0.0
    %1652 = vmatpush1.msra.mxu0 %v1601
    %1653 = vmatprep.subr.mxu0 0.0
    %1654 = vmatpush1.msra.mxu0 %v1600
    %1655 = vmatprep.subr.mxu0 0.0
    %1656 = vmatpush2.msra.mxu0 0.0
    %1657 = vmatprep.subr.mxu0 0.0
    %1658 = vmatpush2.msra.mxu0 0.0
    %1659 = vmatprep.subr.mxu0 0.0
    %1660 = vmatpush2.msra.mxu0 0.0
    %1661 = vmatprep.subr.mxu0 0.0
    %1662 = vmatpush2.msra.mxu0 0.0
    %1663 = vmatprep.subr.mxu0 0.0
    %1664 = vmatpush2.msra.mxu0 0.0
    %1665 = vmatprep.subr.mxu0 0.0
    %1666 = vmatpush2.msra.mxu0 0.0
    %1667 = vmatprep.subr.mxu0 0.0
    %1668 = vmatpush2.msra.mxu0 0.0
    %1669 = vmatprep.subr.mxu0 0.0
    %1670 = vmatpush2.msra.mxu0 0.0
    %1671 = vmatprep.subr.mxu0 0.0
    %1672 = vmatpush2.msra.mxu0 0.0
    %1673 = vmatprep.subr.mxu0 0.0
    %1674 = vmatpush2.msra.mxu0 0.0
    %1675 = vmatprep.subr.mxu0 0.0
    %1676 = vmatpush2.msra.mxu0 0.0
    %1677 = vmatprep.subr.mxu0 0.0
    %1678 = vmatpush2.msra.mxu0 0.0
    %1679 = vmatprep.subr.mxu0 0.0
    %1680 = vmatpush2.msra.mxu0 0.0
    %1681 = vmatprep.subr.mxu0 0.0
    %1682 = vmatpush2.msra.mxu0 0.0
    %1683 = vmatprep.subr.mxu0 0.0
    %1684 = vmatpush2.msra.mxu0 0.0
    %1685 = vmatprep.subr.mxu0 0.0
    %1686 = vmatpush2.msra.mxu0 0.0
    %1687 = vmatprep.mubr.f32.mxu0 0.0
    %1688 = vmatmul.mubr.f32.gmra.mxu0 %v1612
    %v1689 = vpop.f32.mrf.mxu0
    %v1690 = vadd.f32 %v1610, %v1689
    %v1691 = vpop.f32.mrf.mxu0
    %1692 = vmatprep.mubr.f32.mxu0 0.0
    %1693 = vmatmul.mubr.f32.gmra.mxu0 %v1615
    %v1694 = vpop.f32.mrf.mxu0
    %v1695 = vadd.f32 %v1610, %v1694
    %v1696 = vpop.f32.mrf.mxu0
    %1697 = vmatprep.mubr.f32.mxu0 0.0
    %1698 = vmatmul.mubr.f32.gmra.mxu0 %v1618
    %v1699 = vpop.f32.mrf.mxu0
    %v1700 = vadd.f32 %v1610, %v1699
    %v1701 = vpop.f32.mrf.mxu0
    %1702 = vmatprep.mubr.f32.mxu0 0.0
    %1703 = vmatmul.mubr.f32.gmra.mxu0 %v1621
    %v1704 = vpop.f32.mrf.mxu0
    %v1705 = vadd.f32 %v1610, %v1704
    %v1706 = vpop.f32.mrf.mxu0
    %1707 = vdwg.mxu0
    %v1708 = vmax.f32 %v1690, 0.0
    %v1709 = vmax.f32 %v1695, 0.0
    %v1710 = vmax.f32 %v1700, 0.0
    %v1711 = vmax.f32 %v1705, 0.0
    %v1712 = vrot.slane %v1708, 7
    %v1713 = vrot.slane %v1709, 7
    %v1714 = vrot.slane %v1710, 7
    %v1715 = vrot.slane %v1711, 7
    %v1716 = vsel %vm200, %v1714, %v1715
    %v1717 = vsel %vm200, %v1713, %v1714
    %v1718 = vsel %vm200, %v1712, %v1713
    %v1719 = vsel %vm200, %v1715, %v1712
    %v1720 = vsel %vm83, %v1719, 0.0
    %v1721 = vsel %vm84, %v1718, 0.0
    %v1722 = vsel %vm85, %v1717, 0.0
    %v1723 = vsel %vm86, %v1716, 0.0
    %v1724 = vrot.slane %v1708, 1
    %v1725 = vrot.slane %v1709, 1
    %v1726 = vrot.slane %v1710, 1
    %v1727 = vrot.slane %v1711, 1
    %v1728 = vsel %vm213, %v1726, %v1727
    %v1729 = vsel %vm213, %v1725, %v1726
    %v1730 = vsel %vm213, %v1724, %v1725
    %v1731 = vsel %vm213, %v1727, %v1724
    %v1732 = vsel %vm87, %v1730, 0.0
    %v1733 = vsel %vm88, %v1729, 0.0
    %v1734 = vsel %vm89, %v1728, 0.0
    %v1735 = vsel %vm90, %v1731, 0.0
    %1740 = vrot.lane.b32.xlu0 %v1708, 16
    %v1741 = vpop.permute.xlu0 %1740
    %1742 = vrot.lane.b32.xlu0 %v1709, 16
    %v1743 = vpop.permute.xlu0 %1742
    %1744 = vrot.lane.b32.xlu0 %v1710, 16
    %v1745 = vpop.permute.xlu0 %1744
    %1746 = vrot.lane.b32.xlu0 %v1711, 16
    %v1747 = vpop.permute.xlu0 %1746
    %1756 = vrot.lane.b32.xlu0 %v1732, 32
    %v1757 = vpop.permute.xlu0 %1756
    %1758 = vrot.lane.b32.xlu0 %v1733, 32
    %v1759 = vpop.permute.xlu0 %1758
    %1760 = vrot.lane.b32.xlu0 %v1734, 32
    %v1761 = vpop.permute.xlu0 %1760
    %1762 = vrot.lane.b32.xlu0 %v1735, 32
    %v1763 = vpop.permute.xlu0 %1762
    %v1768 = vsel %vm98, %v1720, %v1741
    %v1769 = vsel %vm98, %v1721, %v1743
    %v1770 = vsel %vm98, %v1722, %v1745
    %v1771 = vsel %vm98, %v1723, %v1747
    %v1772 = vsel %vm254, %v1768, %v1757
    %v1773 = vsel %vm254, %v1769, %v1759
    %v1774 = vsel %vm254, %v1770, %v1761
    %v1775 = vsel %vm254, %v1771, %v1763
    %v1776 = vld [vmem:[#allocation2 + $0x180] sm:$0xff]
    %v1777 = vld [vmem:[#allocation2 + $0x188] sm:$0xff]
    %v1778 = vld [vmem:[#allocation2 + $0x190] sm:$0xff]
    %v1779 = vld [vmem:[#allocation2 + $0x198] sm:$0xff]
    %v1780 = vld [vmem:[#allocation2 + $0x1a0] sm:$0xff]
    %v1781 = vld [vmem:[#allocation2 + $0x1a8] sm:$0xff]
    %v1782 = vld [vmem:[#allocation2 + $0x1f0] sm:$0x1]
    %v1783 = vlaneseq
    %v1784 = vshrl.u32 %v1783, 7
    %v1785 = vsub.s32 0, %v1784
    %v1786 = vrot.slane %v1782, %v1785
    %v1788 = vsel %vm270, %v1772, 0
    %v1791 = vsel %vm270, %v1773, 0
    %v1794 = vsel %vm270, %v1774, 0
    %v1797 = vsel %vm270, %v1775, 0
    %1799 = vmatprep.subr.mxu0 0.0
    %1800 = vmatpush1.msra.mxu0 0.0
    %1801 = vmatprep.subr.mxu0 0.0
    %1802 = vmatpush1.msra.mxu0 0.0
    %1803 = vmatprep.subr.mxu0 0.0
    %1804 = vmatpush1.msra.mxu0 0.0
    %1805 = vmatprep.subr.mxu0 0.0
    %1806 = vmatpush1.msra.mxu0 0.0
    %1807 = vmatprep.subr.mxu0 0.0
    %1808 = vmatpush1.msra.mxu0 0.0
    %1809 = vmatprep.subr.mxu0 0.0
    %1810 = vmatpush1.msra.mxu0 0.0
    %1811 = vmatprep.subr.mxu0 0.0
    %1812 = vmatpush1.msra.mxu0 0.0
    %1813 = vmatprep.subr.mxu0 0.0
    %1814 = vmatpush1.msra.mxu0 0.0
    %1815 = vmatprep.subr.mxu0 0.0
    %1816 = vmatpush1.msra.mxu0 0.0
    %1817 = vmatprep.subr.mxu0 0.0
    %1818 = vmatpush1.msra.mxu0 0.0
    %1819 = vmatprep.subr.mxu0 0.0
    %1820 = vmatpush1.msra.mxu0 %v1781
    %1821 = vmatprep.subr.mxu0 0.0
    %1822 = vmatpush1.msra.mxu0 %v1780
    %1823 = vmatprep.subr.mxu0 0.0
    %1824 = vmatpush1.msra.mxu0 %v1779
    %1825 = vmatprep.subr.mxu0 0.0
    %1826 = vmatpush1.msra.mxu0 %v1778
    %1827 = vmatprep.subr.mxu0 0.0
    %1828 = vmatpush1.msra.mxu0 %v1777
    %1829 = vmatprep.subr.mxu0 0.0
    %1830 = vmatpush1.msra.mxu0 %v1776
    %1831 = vmatprep.subr.mxu0 0.0
    %1832 = vmatpush2.msra.mxu0 0.0
    %1833 = vmatprep.subr.mxu0 0.0
    %1834 = vmatpush2.msra.mxu0 0.0
    %1835 = vmatprep.subr.mxu0 0.0
    %1836 = vmatpush2.msra.mxu0 0.0
    %1837 = vmatprep.subr.mxu0 0.0
    %1838 = vmatpush2.msra.mxu0 0.0
    %1839 = vmatprep.subr.mxu0 0.0
    %1840 = vmatpush2.msra.mxu0 0.0
    %1841 = vmatprep.subr.mxu0 0.0
    %1842 = vmatpush2.msra.mxu0 0.0
    %1843 = vmatprep.subr.mxu0 0.0
    %1844 = vmatpush2.msra.mxu0 0.0
    %1845 = vmatprep.subr.mxu0 0.0
    %1846 = vmatpush2.msra.mxu0 0.0
    %1847 = vmatprep.subr.mxu0 0.0
    %1848 = vmatpush2.msra.mxu0 0.0
    %1849 = vmatprep.subr.mxu0 0.0
    %1850 = vmatpush2.msra.mxu0 0.0
    %1851 = vmatprep.subr.mxu0 0.0
    %1852 = vmatpush2.msra.mxu0 0.0
    %1853 = vmatprep.subr.mxu0 0.0
    %1854 = vmatpush2.msra.mxu0 0.0
    %1855 = vmatprep.subr.mxu0 0.0
    %1856 = vmatpush2.msra.mxu0 0.0
    %1857 = vmatprep.subr.mxu0 0.0
    %1858 = vmatpush2.msra.mxu0 0.0
    %1859 = vmatprep.subr.mxu0 0.0
    %1860 = vmatpush2.msra.mxu0 0.0
    %1861 = vmatprep.subr.mxu0 0.0
    %1862 = vmatpush2.msra.mxu0 0.0
    %1863 = vmatprep.mubr.f32.mxu0 0.0
    %1864 = vmatmul.mubr.f32.gmra.mxu0 %v1788
    %v1865 = vpop.f32.mrf.mxu0
    %v1866 = vadd.f32 %v1786, %v1865
    %v1867 = vpop.f32.mrf.mxu0
    %1868 = vmatprep.mubr.f32.mxu0 0.0
    %1869 = vmatmul.mubr.f32.gmra.mxu0 %v1791
    %v1870 = vpop.f32.mrf.mxu0
    %v1871 = vadd.f32 %v1786, %v1870
    %v1872 = vpop.f32.mrf.mxu0
    %1873 = vmatprep.mubr.f32.mxu0 0.0
    %1874 = vmatmul.mubr.f32.gmra.mxu0 %v1794
    %v1875 = vpop.f32.mrf.mxu0
    %v1876 = vadd.f32 %v1786, %v1875
    %v1877 = vpop.f32.mrf.mxu0
    %1878 = vmatprep.mubr.f32.mxu0 0.0
    %1879 = vmatmul.mubr.f32.gmra.mxu0 %v1797
    %v1880 = vpop.f32.mrf.mxu0
    %v1881 = vadd.f32 %v1786, %v1880
    %v1882 = vpop.f32.mrf.mxu0
    %1883 = vdwg.mxu0
    %v1884 = vadd.f32 %v1866, %v1356
    %v1885 = vadd.f32 %v1871, %v1357
    %v1886 = vadd.f32 %v1876, %v1358
    %v1887 = vadd.f32 %v1881, %v1359
    %v1888 = vmax.f32 %v1884, 0.0
    %v1889 = vmax.f32 %v1885, 0.0
    %v1890 = vmax.f32 %v1886, 0.0
    %v1891 = vmax.f32 %v1887, 0.0
    %v1892 = vld [vmem:[#allocation2 + $0x1e0] sm:$0xff]
    %v1894 = vsel %vm254, %v1892, 0
    %1896 = vmatprep.subr.mxu0 0.0
    %1897 = vmatpush1.msra.mxu0 0.0
    %1898 = vmatprep.subr.mxu0 0.0
    %1899 = vmatpush1.msra.mxu0 0.0
    %1900 = vmatprep.subr.mxu0 0.0
    %1901 = vmatpush1.msra.mxu0 0.0
    %1902 = vmatprep.subr.mxu0 0.0
    %1903 = vmatpush1.msra.mxu0 0.0
    %1904 = vmatprep.subr.mxu0 0.0
    %1905 = vmatpush1.msra.mxu0 0.0
    %1906 = vmatprep.subr.mxu0 0.0
    %1907 = vmatpush1.msra.mxu0 0.0
    %1908 = vmatprep.subr.mxu0 0.0
    %1909 = vmatpush1.msra.mxu0 0.0
    %1910 = vmatprep.subr.mxu0 0.0
    %1911 = vmatpush1.msra.mxu0 0.0
    %1912 = vmatprep.subr.mxu0 0.0
    %1913 = vmatpush1.msra.mxu0 0.0
    %1914 = vmatprep.subr.mxu0 0.0
    %1915 = vmatpush1.msra.mxu0 0.0
    %1916 = vmatprep.subr.mxu0 0.0
    %1917 = vmatpush1.msra.mxu0 0.0
    %1918 = vmatprep.subr.mxu0 0.0
    %1919 = vmatpush1.msra.mxu0 0.0
    %1920 = vmatprep.subr.mxu0 0.0
    %1921 = vmatpush1.msra.mxu0 %v1891
    %1922 = vmatprep.subr.mxu0 0.0
    %1923 = vmatpush1.msra.mxu0 %v1890
    %1924 = vmatprep.subr.mxu0 0.0
    %1925 = vmatpush1.msra.mxu0 %v1889
    %1926 = vmatprep.subr.mxu0 0.0
    %1927 = vmatpush1.msra.mxu0 %v1888
    %1928 = vmatprep.subr.mxu0 0.0
    %1929 = vmatpush2.msra.mxu0 0.0
    %1930 = vmatprep.subr.mxu0 0.0
    %1931 = vmatpush2.msra.mxu0 0.0
    %1932 = vmatprep.subr.mxu0 0.0
    %1933 = vmatpush2.msra.mxu0 0.0
    %1934 = vmatprep.subr.mxu0 0.0
    %1935 = vmatpush2.msra.mxu0 0.0
    %1936 = vmatprep.subr.mxu0 0.0
    %1937 = vmatpush2.msra.mxu0 0.0
    %1938 = vmatprep.subr.mxu0 0.0
    %1939 = vmatpush2.msra.mxu0 0.0
    %1940 = vmatprep.subr.mxu0 0.0
    %1941 = vmatpush2.msra.mxu0 0.0
    %1942 = vmatprep.subr.mxu0 0.0
    %1943 = vmatpush2.msra.mxu0 0.0
    %1944 = vmatprep.subr.mxu0 0.0
    %1945 = vmatpush2.msra.mxu0 0.0
    %1946 = vmatprep.subr.mxu0 0.0
    %1947 = vmatpush2.msra.mxu0 0.0
    %1948 = vmatprep.subr.mxu0 0.0
    %1949 = vmatpush2.msra.mxu0 0.0
    %1950 = vmatprep.subr.mxu0 0.0
    %1951 = vmatpush2.msra.mxu0 0.0
    %1952 = vmatprep.subr.mxu0 0.0
    %1953 = vmatpush2.msra.mxu0 0.0
    %1954 = vmatprep.subr.mxu0 0.0
    %1955 = vmatpush2.msra.mxu0 0.0
    %1956 = vmatprep.subr.mxu0 0.0
    %1957 = vmatpush2.msra.mxu0 0.0
    %1958 = vmatprep.subr.mxu0 0.0
    %1959 = vmatpush2.msra.mxu0 0.0
    %1960 = vmatprep.mubr.f32.mxu0 0.0
    %1961 = vmatmul.mubr.f32.gmra.mxu0 %v1894
    %v1962 = vpop.f32.mrf.mxu0
    %v1963 = vadd.f32 0.0, %v1962
    %v1964 = vpop.f32.mrf.mxu0
    %1965 = vdwg.mxu0
    %v1966 = vld [vmem:[#allocation2 + $0x1d0] sm:$0xff]
    %v1967 = vld [vmem:[#allocation2 + $0x1d8] sm:$0xff]
    %v1968 = vld [vmem:[#allocation2 + $0x1f3] sm:$0x1]
    %v1969 = vlaneseq
    %v1970 = vshrl.u32 %v1969, 7
    %v1971 = vsub.s32 0, %v1970
    %v1972 = vrot.slane %v1968, %v1971
    %v1974 = vsel %vm98, %v1963, 0
    %1976 = vmatprep.subr.mxu0 0.0
    %1977 = vmatpush1.msra.mxu0 0.0
    %1978 = vmatprep.subr.mxu0 0.0
    %1979 = vmatpush1.msra.mxu0 0.0
    %1980 = vmatprep.subr.mxu0 0.0
    %1981 = vmatpush1.msra.mxu0 0.0
    %1982 = vmatprep.subr.mxu0 0.0
    %1983 = vmatpush1.msra.mxu0 0.0
    %1984 = vmatprep.subr.mxu0 0.0
    %1985 = vmatpush1.msra.mxu0 0.0
    %1986 = vmatprep.subr.mxu0 0.0
    %1987 = vmatpush1.msra.mxu0 0.0
    %1988 = vmatprep.subr.mxu0 0.0
    %1989 = vmatpush1.msra.mxu0 0.0
    %1990 = vmatprep.subr.mxu0 0.0
    %1991 = vmatpush1.msra.mxu0 0.0
    %1992 = vmatprep.subr.mxu0 0.0
    %1993 = vmatpush1.msra.mxu0 0.0
    %1994 = vmatprep.subr.mxu0 0.0
    %1995 = vmatpush1.msra.mxu0 0.0
    %1996 = vmatprep.subr.mxu0 0.0
    %1997 = vmatpush1.msra.mxu0 0.0
    %1998 = vmatprep.subr.mxu0 0.0
    %1999 = vmatpush1.msra.mxu0 0.0
    %2000 = vmatprep.subr.mxu0 0.0
    %2001 = vmatpush1.msra.mxu0 0.0
    %2002 = vmatprep.subr.mxu0 0.0
    %2003 = vmatpush1.msra.mxu0 0.0
    %2004 = vmatprep.subr.mxu0 0.0
    %2005 = vmatpush1.msra.mxu0 %v1967
    %2006 = vmatprep.subr.mxu0 0.0
    %2007 = vmatpush1.msra.mxu0 %v1966
    %2008 = vmatprep.subr.mxu0 0.0
    %2009 = vmatpush2.msra.mxu0 0.0
    %2010 = vmatprep.subr.mxu0 0.0
    %2011 = vmatpush2.msra.mxu0 0.0
    %2012 = vmatprep.subr.mxu0 0.0
    %2013 = vmatpush2.msra.mxu0 0.0
    %2014 = vmatprep.subr.mxu0 0.0
    %2015 = vmatpush2.msra.mxu0 0.0
    %2016 = vmatprep.subr.mxu0 0.0
    %2017 = vmatpush2.msra.mxu0 0.0
    %2018 = vmatprep.subr.mxu0 0.0
    %2019 = vmatpush2.msra.mxu0 0.0
    %2020 = vmatprep.subr.mxu0 0.0
    %2021 = vmatpush2.msra.mxu0 0.0
    %2022 = vmatprep.subr.mxu0 0.0
    %2023 = vmatpush2.msra.mxu0 0.0
    %2024 = vmatprep.subr.mxu0 0.0
    %2025 = vmatpush2.msra.mxu0 0.0
    %2026 = vmatprep.subr.mxu0 0.0
    %2027 = vmatpush2.msra.mxu0 0.0
    %2028 = vmatprep.subr.mxu0 0.0
    %2029 = vmatpush2.msra.mxu0 0.0
    %2030 = vmatprep.subr.mxu0 0.0
    %2031 = vmatpush2.msra.mxu0 0.0
    %2032 = vmatprep.subr.mxu0 0.0
    %2033 = vmatpush2.msra.mxu0 0.0
    %2034 = vmatprep.subr.mxu0 0.0
    %2035 = vmatpush2.msra.mxu0 0.0
    %2036 = vmatprep.subr.mxu0 0.0
    %2037 = vmatpush2.msra.mxu0 0.0
    %2038 = vmatprep.subr.mxu0 0.0
    %2039 = vmatpush2.msra.mxu0 0.0
    %2040 = vmatprep.mubr.f32.mxu0 0.0
    %2041 = vmatmul.mubr.f32.gmra.mxu0 %v1974
    %v2042 = vpop.f32.mrf.mxu0
    %v2043 = vadd.f32 %v1972, %v2042
    %v2044 = vpop.f32.mrf.mxu0
    %2045 = vdwg.mxu0
    %2046 = vst [vmem:[#allocation5] sm:$0xff] %v2043
    // Predicated region
    $region14: #{tpu_custom_call.1} parent=1 // pred_check
      _
    $region15: #{tpu_custom_call.1} parent=1 // pred_check_branch
      %2048 = sbr.rel (0) target = $region17
    $region16: #{tpu_custom_call.1} parent=1 // pred_region
      %s2050 = ssub.s32 128, 128
      %2051 = vsyncadd [#allocation4], %s2050
      %s2053 = sshll.u32 [#allocation5], 4
      %s2054 = int_to_ptr.vmem [resolvable:$true] %s2053
      %2056 = dma.vmem_to_hbm [thread:$0]  %s2054, 128, %s2, [#allocation4]
    $region17: #{tpu_custom_call.1} parent=1 // pred_fallthru
      _
    // Predicated region
    $region18: #{tpu_custom_call.1} parent=1 // pred_check
      _
    $region19: #{tpu_custom_call.1} parent=1 // pred_check_branch
      %2058 = sbr.rel (0) target = $region21
    $region20: #{tpu_custom_call.1} parent=1 // pred_region
      %2059 = dma.done [#allocation4], 128
    $region21: #{tpu_custom_call.1} parent=1 // pred_fallthru
      _
    %2060 = vsyncpa [#allocation3], 1
    %2061 = vsyncpa [#allocation4], 1

</llo_original>
